<compile_context>
chip_gen: v5e
topology: v5e:2x2
jax: 0.10.0
libtpu: 0.0.40
codegen_flags: <defaults>
</compile_context>

<pallas_src>
import functools
import math

import jax
import jax.numpy as jnp
from jax.experimental import pallas as pl
from jax.experimental.pallas import tpu as pltpu

# ---------------- config (small, deterministic, synthetic) ----------------
BATCH = 2
SEQ = 8
HIDDEN = 128                      # config.hidden_size
NUM_HEADS = 4                     # config.num_attention_heads
NUM_KV_HEADS = 2                  # config.num_heads (key/value heads)
HEAD_DIM = HIDDEN // NUM_HEADS    # 32
N_REP = NUM_HEADS // NUM_KV_HEADS # num_key_value_groups
KV_DIM = NUM_KV_HEADS * HEAD_DIM  # 64
INTERMEDIATE = HIDDEN * 4         # 512
MAX_POS = 64                      # config.d_model (rope max_position_embeddings)
ROPE_BASE = 10000.0
RMS_EPS = 1e-6


# ---------------------------- fused Pallas kernel --------------------------
def _decoder_kernel(x_ref, mask_ref, cosq_ref, sinq_ref, cosk_ref, sink_ref,
                    ln_in_ref, ln_post_ref, wqkv_ref, wo_ref, wgu_ref, wd_ref,
                    o_ref, *, eps, num_heads, head_dim, hidden, intermediate):
    """One grid step = one batch element; everything stays in VMEM/vregs."""
    x = x_ref[0].astype(jnp.float32)                        # (S, H)
    mask = mask_ref[0, 0].astype(jnp.float32)               # (S, S)

    # ---- input RMSNorm (f32) ----
    var = jnp.mean(x * x, axis=-1, keepdims=True)
    h = (x * jax.lax.rsqrt(var + eps)) * ln_in_ref[...]     # (S, H)

    # ---- fused QKV (+ rotate-half columns, + repeat_kv) projection.
    # Weights are bf16; activations cast to bf16; accumulate f32 on the MXU.
    proj = jnp.dot(h.astype(jnp.bfloat16), wqkv_ref[...],
                   preferred_element_type=jnp.float32)      # (S, 5H)
    # Every segment is exactly `hidden` (=128) lanes wide -> aligned slices.
    q     = proj[:, 0 * hidden:1 * hidden]
    q_rot = proj[:, 1 * hidden:2 * hidden]
    k     = proj[:, 2 * hidden:3 * hidden]
    k_rot = proj[:, 3 * hidden:4 * hidden]
    v     = proj[:, 4 * hidden:5 * hidden]

    # RoPE as element-wise FMA (f32).  The 1/sqrt(head_dim) attention scale is
    # pre-folded into the q cos/sin tables; rotate_half is folded into weights.
    q = q * cosq_ref[...] + q_rot * sinq_ref[...]           # (S, H)
    k = k * cosk_ref[...] + k_rot * sink_ref[...]           # (S, H)

    # ---- attention.  repeat_kv is already folded into the k/v weight
    # columns, so head h simply reads lanes [h*D, (h+1)*D) of q, k and v.
    # The output projection is accumulated per head (no concat), fusing the
    # residual add as well.
    dn_qkt = (((1,), (1,)), ((), ()))    # contract last dim of both -> no .T
    y = x                                                    # residual (f32)
    for hh in range(num_heads):
        lo, hi = hh * head_dim, (hh + 1) * head_dim
        qh = q[:, lo:hi]                                     # (S, D)
        kh = k[:, lo:hi]                                     # (S, D)
        vh = v[:, lo:hi]                                     # (S, D)
        s = jax.lax.dot_general(qh, kh, dimension_numbers=dn_qkt,
                                preferred_element_type=jnp.float32)   # (S, S)
        s = s + mask
        s = s - jnp.max(s, axis=-1, keepdims=True)
        p = jnp.exp(s)
        p = p * pl.reciprocal(jnp.sum(p, axis=-1, keepdims=True), approx=True)
        oh = jnp.dot(p, vh, preferred_element_type=jnp.float32)       # (S, D)
        y = y + jnp.dot(oh.astype(jnp.bfloat16), wo_ref[lo:hi, :],
                        preferred_element_type=jnp.float32)           # (S, H)

    # ---- post-attention RMSNorm (f32) ----
    var2 = jnp.mean(y * y, axis=-1, keepdims=True)
    h2 = (y * jax.lax.rsqrt(var2 + eps)) * ln_post_ref[...]

    # ---- fused gate|up matmul + SiLU + down-proj + fused residual ----
    gu = jnp.dot(h2.astype(jnp.bfloat16), wgu_ref[...],
                 preferred_element_type=jnp.float32)         # (S, 2I)
    gate = gu[:, :intermediate]
    up = gu[:, intermediate:]
    act = gate * jax.nn.sigmoid(gate) * up                   # silu(gate) * up
    y = y + jnp.dot(act.astype(jnp.bfloat16), wd_ref[...],
                    preferred_element_type=jnp.float32)

    o_ref[0] = y.astype(o_ref.dtype)


# ---------------------------- host-side wrapper ----------------------------
def rope_cache():
    inv_freq = 1.0 / (ROPE_BASE ** (
        jnp.arange(0, HEAD_DIM, 2, dtype=jnp.float32) / HEAD_DIM))
    t = jnp.arange(MAX_POS, dtype=jnp.float32)
    freqs = jnp.outer(t, inv_freq)
    emb = jnp.concatenate([freqs, freqs], axis=-1)           # (MAX_POS, HEAD_DIM)
    return jnp.cos(emb), jnp.sin(emb)


def prepare_params(params):
    """One-time weight prep: transpose, fold rotate_half + repeat_kv into the
    columns, concatenate QKV and gate|up, cast weights to bf16, build rope
    tables (attention scale folded into the q tables)."""
    half = HEAD_DIM // 2

    def rothalf_cols(w_t, n_heads):
        # rotate_half(h @ W) == h @ rothalf_cols(W)  (position-independent).
        din = w_t.shape[0]
        w3 = w_t.reshape(din, n_heads, HEAD_DIM)
        return jnp.concatenate([-w3[..., half:], w3[..., :half]],
                               axis=-1).reshape(din, n_heads * HEAD_DIM)

    def repeat_kv_cols(w_t):
        # Fold repeat_kv into the weight: (H, n_kv*D) -> (H, n_heads*D);
        # query head h then reads the columns of kv group h // n_rep.
        din = w_t.shape[0]
        w3 = w_t.reshape(din, NUM_KV_HEADS, HEAD_DIM)
        return jnp.repeat(w3, N_REP, axis=1).reshape(din, NUM_HEADS * HEAD_DIM)

    wq_t = params["wq"].T                                    # (H, H)
    wk_t = repeat_kv_cols(params["wk"].T)                    # (H, H)
    wv_t = repeat_kv_cols(params["wv"].T)                    # (H, H)
    w_qkv = jnp.concatenate(
        [wq_t, rothalf_cols(wq_t, NUM_HEADS),
         wk_t, rothalf_cols(wk_t, NUM_HEADS), wv_t], axis=1)  # (H, 5H)
    w_gu = jnp.concatenate([params["wg"].T, params["wu"].T], axis=1)  # (H, 2I)

    cos_c, sin_c = rope_cache()                              # (MAX_POS, D)
    scale = 1.0 / math.sqrt(HEAD_DIM)
    return {
        "ln_in": params["ln_in"].reshape(1, HIDDEN),
        "ln_post": params["ln_post"].reshape(1, HIDDEN),
        # bf16 weights for the MXU (accumulation stays f32 in-kernel).
        "w_qkv": w_qkv.astype(jnp.bfloat16),
        "wo_t": params["wo"].T.astype(jnp.bfloat16),         # (H, H)
        "w_gu": w_gu.astype(jnp.bfloat16),
        "wd_t": params["wd"].T.astype(jnp.bfloat16),         # (I, H)
        # attention scale folded into the q rope tables (f32 rope math):
        "cos_q": jnp.tile(cos_c, (1, NUM_HEADS)) * scale,    # (MAX_POS, H)
        "sin_q": jnp.tile(sin_c, (1, NUM_HEADS)) * scale,
        "cos_k": jnp.tile(cos_c, (1, NUM_HEADS)),            # (MAX_POS, H)
        "sin_k": jnp.tile(sin_c, (1, NUM_HEADS)),
    }


def decoder_layer(prep, hidden_states, attention_mask, position_ids):
    B, S, H = hidden_states.shape
    # NOTE: assumes position_ids are shared across the batch (true in this
    # harness and for standard training); pass (B, S, .) blocks otherwise.
    pos = position_ids[0]
    cos_q = prep["cos_q"][pos]                               # (S, H)
    sin_q = prep["sin_q"][pos]
    cos_k = prep["cos_k"][pos]
    sin_k = prep["sin_k"][pos]

    kernel = functools.partial(
        _decoder_kernel, eps=RMS_EPS, num_heads=NUM_HEADS, head_dim=HEAD_DIM,
        hidden=H, intermediate=INTERMEDIATE)

    return pl.pallas_call(
        kernel,
        out_shape=jax.ShapeDtypeStruct((B, S, H), hidden_states.dtype),
        grid=(B,),
        in_specs=[
            pl.BlockSpec((1, S, H), lambda b: (b, 0, 0)),                 # x
            pl.BlockSpec((1, 1, S, S), lambda b: (b, 0, 0, 0)),           # mask
            pl.BlockSpec((S, H), lambda b: (0, 0)),                       # cos_q
            pl.BlockSpec((S, H), lambda b: (0, 0)),                       # sin_q
            pl.BlockSpec((S, H), lambda b: (0, 0)),                       # cos_k
            pl.BlockSpec((S, H), lambda b: (0, 0)),                       # sin_k
            pl.BlockSpec((1, H), lambda b: (0, 0)),                       # ln_in
            pl.BlockSpec((1, H), lambda b: (0, 0)),                       # ln_post
            pl.BlockSpec((H, 5 * H), lambda b: (0, 0)),                   # w_qkv
            pl.BlockSpec((H, H), lambda b: (0, 0)),                       # wo_t
            pl.BlockSpec((H, 2 * INTERMEDIATE), lambda b: (0, 0)),        # w_gu
            pl.BlockSpec((INTERMEDIATE, H), lambda b: (0, 0)),            # wd_t
        ],
        out_specs=pl.BlockSpec((1, S, H), lambda b: (b, 0, 0)),
        compiler_params=pltpu.CompilerParams(
            dimension_semantics=("parallel",)),   # 2-way batch split on v7x
    )(hidden_states, attention_mask, cos_q, sin_q, cos_k, sin_k,
      prep["ln_in"], prep["ln_post"], prep["w_qkv"], prep["wo_t"],
      prep["w_gu"], prep["wd_t"])


# ----------------------- pure-JAX reference (checking) ---------------------
def ref_decoder_layer(params, hidden_states, attention_mask, position_ids):
    hp = jax.lax.Precision.HIGHEST
    B, S, H = hidden_states.shape

    def rms(h, w):
        hf = h.astype(jnp.float32)
        var = jnp.mean(hf * hf, axis=-1, keepdims=True)
        return w * (hf * jax.lax.rsqrt(var + RMS_EPS)).astype(h.dtype)

    def rot_half(x):
        x1 = x[..., :HEAD_DIM // 2]
        x2 = x[..., HEAD_DIM // 2:]
        return jnp.concatenate([-x2, x1], axis=-1)

    residual = hidden_states
    h = rms(hidden_states, params["ln_in"])
    q = jnp.einsum("bsh,oh->bso", h, params["wq"], precision=hp)
    k = jnp.einsum("bsh,oh->bso", h, params["wk"], precision=hp)
    v = jnp.einsum("bsh,oh->bso", h, params["wv"], precision=hp)
    q = q.reshape(B, S, NUM_HEADS, HEAD_DIM).transpose(0, 2, 1, 3)
    k = k.reshape(B, S, NUM_KV_HEADS, HEAD_DIM).transpose(0, 2, 1, 3)
    v = v.reshape(B, S, NUM_KV_HEADS, HEAD_DIM).transpose(0, 2, 1, 3)

    cos_cache, sin_cache = rope_cache()
    cos = cos_cache[position_ids][:, None]                   # (B,1,S,D)
    sin = sin_cache[position_ids][:, None]
    q = q * cos + rot_half(q) * sin
    k = k * cos + rot_half(k) * sin

    k = jnp.repeat(k, N_REP, axis=1)
    v = jnp.repeat(v, N_REP, axis=1)
    scores = jnp.einsum("bhqd,bhkd->bhqk", q, k, precision=hp) / math.sqrt(HEAD_DIM)
    scores = scores + attention_mask
    p = jax.nn.softmax(scores.astype(jnp.float32), axis=-1)
    attn = jnp.einsum("bhqk,bhkd->bhqd", p, v, precision=hp)
    attn = attn.transpose(0, 2, 1, 3).reshape(B, S, H)
    attn = jnp.einsum("bsi,oi->bso", attn, params["wo"], precision=hp)
    h = residual + attn

    residual = h
    hn = rms(h, params["ln_post"])
    g = jnp.einsum("bsh,ih->bsi", hn, params["wg"], precision=hp)
    u = jnp.einsum("bsh,ih->bsi", hn, params["wu"], precision=hp)
    act = g * jax.nn.sigmoid(g) * u
    down = jnp.einsum("bsi,hi->bsh", act, params["wd"], precision=hp)
    return residual + down


# ------------------------------ params init --------------------------------
def init_params(key):
    keys = jax.random.split(key, 7)
    s = 0.02
    return {
        # RMSNorm weights init to ones, as in the module's __init__.
        "ln_in": jnp.ones((HIDDEN,), jnp.float32),
        "ln_post": jnp.ones((HIDDEN,), jnp.float32),
        # nn.Linear weights stored torch-style (out_features, in_features).
        "wq": s * jax.random.normal(keys[0], (HIDDEN, HIDDEN), jnp.float32),
        "wk": s * jax.random.normal(keys[1], (KV_DIM, HIDDEN), jnp.float32),
        "wv": s * jax.random.normal(keys[2], (KV_DIM, HIDDEN), jnp.float32),
        "wo": s * jax.random.normal(keys[3], (HIDDEN, HIDDEN), jnp.float32),
        "wg": s * jax.random.normal(keys[4], (INTERMEDIATE, HIDDEN), jnp.float32),
        "wu": s * jax.random.normal(keys[5], (INTERMEDIATE, HIDDEN), jnp.float32),
        "wd": s * jax.random.normal(keys[6], (HIDDEN, INTERMEDIATE), jnp.float32),
    }


if __name__ == "__main__":
    key = jax.random.PRNGKey(0)
    k_params, k_x = jax.random.split(key)
    params = init_params(k_params)
    prep = prepare_params(params)        # one-time weight/rope preparation

    hidden_states = jax.random.normal(k_x, (BATCH, SEQ, HIDDEN), jnp.float32)
    position_ids = jnp.broadcast_to(
        jnp.arange(SEQ, dtype=jnp.int32), (BATCH, SEQ))
    causal = jnp.triu(jnp.full((SEQ, SEQ), -1e9, dtype=jnp.float32), k=1)
    attention_mask = jnp.broadcast_to(causal, (BATCH, 1, SEQ, SEQ))

    fwd = jax.jit(decoder_layer)
    out = jax.block_until_ready(
        fwd(prep, hidden_states, attention_mask, position_ids))

    ref = ref_decoder_layer(params, hidden_states, attention_mask, position_ids)
    err = float(jnp.max(jnp.abs(out - ref)))

    assert out.shape == (BATCH, SEQ, HIDDEN)
    assert bool(jnp.all(jnp.isfinite(out)))
    # Tolerance re-validated for bf16 MXU operands (expected max err ~2e-3).
    assert err < 3e-2, f"max abs err vs f32 reference: {err}"
    print("KERNEL_OK")
</pallas_src>

<mosaic_0001>
module attributes {stable_mosaic.version = 11 : i64} {
  func.func @_decoder_kernel(%arg0: i32, %arg1: memref<1x8x128xf32, #tpu.memory_space<vmem>>, %arg2: memref<1x1x8x8xf32, #tpu.memory_space<vmem>>, %arg3: memref<8x128xf32, #tpu.memory_space<vmem>>, %arg4: memref<8x128xf32, #tpu.memory_space<vmem>>, %arg5: memref<8x128xf32, #tpu.memory_space<vmem>>, %arg6: memref<8x128xf32, #tpu.memory_space<vmem>>, %arg7: memref<1x128xf32, #tpu.memory_space<vmem>>, %arg8: memref<1x128xf32, #tpu.memory_space<vmem>>, %arg9: memref<128x640xbf16, #tpu.memory_space<vmem>>, %arg10: memref<128x128xbf16, #tpu.memory_space<vmem>>, %arg11: memref<128x1024xbf16, #tpu.memory_space<vmem>>, %arg12: memref<512x128xbf16, #tpu.memory_space<vmem>>, %arg13: memref<1x8x128xf32, #tpu.memory_space<vmem>>) attributes {dimension_semantics = [#tpu.dimension_semantics<parallel>], iteration_bounds = array<i64: 2>, scalar_prefetch = 0 : i64, scratch_operands = 0 : i64, tpu.core_type = #tpu.core_type<tc>, window_params = [{transform_indices = @transform_0, window_bounds = array<i64: 1, 8, 128>}, {transform_indices = @transform_1, window_bounds = array<i64: 1, 1, 8, 8>}, {pipeline_mode = #tpu.pipeline_mode<synchronous>, transform_indices = @transform_2, window_bounds = array<i64: 8, 128>}, {pipeline_mode = #tpu.pipeline_mode<synchronous>, transform_indices = @transform_3, window_bounds = array<i64: 8, 128>}, {pipeline_mode = #tpu.pipeline_mode<synchronous>, transform_indices = @transform_4, window_bounds = array<i64: 8, 128>}, {pipeline_mode = #tpu.pipeline_mode<synchronous>, transform_indices = @transform_5, window_bounds = array<i64: 8, 128>}, {pipeline_mode = #tpu.pipeline_mode<synchronous>, transform_indices = @transform_6, window_bounds = array<i64: 1, 128>}, {pipeline_mode = #tpu.pipeline_mode<synchronous>, transform_indices = @transform_7, window_bounds = array<i64: 1, 128>}, {pipeline_mode = #tpu.pipeline_mode<synchronous>, transform_indices = @transform_8, window_bounds = array<i64: 128, 640>}, {pipeline_mode = #tpu.pipeline_mode<synchronous>, transform_indices = @transform_9, window_bounds = array<i64: 128, 128>}, {pipeline_mode = #tpu.pipeline_mode<synchronous>, transform_indices = @transform_10, window_bounds = array<i64: 128, 1024>}, {pipeline_mode = #tpu.pipeline_mode<synchronous>, transform_indices = @transform_11, window_bounds = array<i64: 512, 128>}, {transform_indices = @transform_12, window_bounds = array<i64: 1, 8, 128>}]} {
    %c0 = arith.constant 0 : index
    %c0_0 = arith.constant 0 : index
    %c0_1 = arith.constant 0 : index
    %0 = vector.load %arg1[%c0, %c0_0, %c0_1] : memref<1x8x128xf32, #tpu.memory_space<vmem>>, vector<1x8x128xf32>
    %1 = vector.shape_cast %0 : vector<1x8x128xf32> to vector<8x128xf32>
    %c0_2 = arith.constant 0 : index
    %c0_3 = arith.constant 0 : index
    %c0_4 = arith.constant 0 : index
    %c0_5 = arith.constant 0 : index
    %2 = vector.load %arg2[%c0_2, %c0_3, %c0_4, %c0_5] : memref<1x1x8x8xf32, #tpu.memory_space<vmem>>, vector<1x1x8x8xf32>
    %3 = vector.shape_cast %2 : vector<1x1x8x8xf32> to vector<8x8xf32>
    %4 = arith.mulf %1, %1 : vector<8x128xf32>
    %cst = arith.constant dense<0.000000e+00> : vector<8xf32>
    %5 = vector.multi_reduction <add>, %4, %cst [1] : vector<8x128xf32> to vector<8xf32>
    %6 = vector.shape_cast %5 : vector<8xf32> to vector<8x1xf32>
    %cst_6 = arith.constant 1.280000e+02 : f32
    %7 = vector.broadcast %cst_6 : f32 to vector<8x1xf32>
    %8 = arith.divf %6, %7 : vector<8x1xf32>
    %cst_7 = arith.constant 9.99999997E-7 : f32
    %9 = vector.broadcast %cst_7 : f32 to vector<8x1xf32>
    %10 = arith.addf %8, %9 : vector<8x1xf32>
    %11 = math.rsqrt %10 : vector<8x1xf32>
    %12 = vector.broadcast %11 : vector<8x1xf32> to vector<8x128xf32>
    %13 = arith.mulf %1, %12 : vector<8x128xf32>
    %c0_8 = arith.constant 0 : index
    %c0_9 = arith.constant 0 : index
    %14 = vector.load %arg7[%c0_8, %c0_9] : memref<1x128xf32, #tpu.memory_space<vmem>>, vector<1x128xf32>
    %15 = vector.broadcast %14 : vector<1x128xf32> to vector<8x128xf32>
    %16 = arith.mulf %13, %15 : vector<8x128xf32>
    %17 = arith.truncf %16 : vector<8x128xf32> to vector<8x128xbf16>
    %c0_10 = arith.constant 0 : index
    %c0_11 = arith.constant 0 : index
    %18 = vector.load %arg9[%c0_10, %c0_11] : memref<128x640xbf16, #tpu.memory_space<vmem>>, vector<128x640xbf16>
    %cst_12 = arith.constant dense<0.000000e+00> : vector<8x640xf32>
    %19 = tpu.matmul %17, %18, %cst_12 {dimension_numbers = #tpu.dot_dimension_numbers<[1], [0], [0], [1], [0, 0, 1, 1], [], []>} : vector<8x128xbf16>, vector<128x640xbf16>, vector<8x640xf32> -> vector<8x640xf32>
    %20 = vector.extract_strided_slice %19 {offsets = [0, 0], sizes = [8, 128], strides = [1, 1]} : vector<8x640xf32> to vector<8x128xf32>
    %21 = vector.extract_strided_slice %19 {offsets = [0, 128], sizes = [8, 128], strides = [1, 1]} : vector<8x640xf32> to vector<8x128xf32>
    %22 = vector.extract_strided_slice %19 {offsets = [0, 256], sizes = [8, 128], strides = [1, 1]} : vector<8x640xf32> to vector<8x128xf32>
    %23 = vector.extract_strided_slice %19 {offsets = [0, 384], sizes = [8, 128], strides = [1, 1]} : vector<8x640xf32> to vector<8x128xf32>
    %24 = vector.extract_strided_slice %19 {offsets = [0, 512], sizes = [8, 128], strides = [1, 1]} : vector<8x640xf32> to vector<8x128xf32>
    %c0_13 = arith.constant 0 : index
    %c0_14 = arith.constant 0 : index
    %25 = vector.load %arg3[%c0_13, %c0_14] : memref<8x128xf32, #tpu.memory_space<vmem>>, vector<8x128xf32>
    %26 = arith.mulf %20, %25 : vector<8x128xf32>
    %c0_15 = arith.constant 0 : index
    %c0_16 = arith.constant 0 : index
    %27 = vector.load %arg4[%c0_15, %c0_16] : memref<8x128xf32, #tpu.memory_space<vmem>>, vector<8x128xf32>
    %28 = arith.mulf %21, %27 : vector<8x128xf32>
    %29 = arith.addf %26, %28 : vector<8x128xf32>
    %c0_17 = arith.constant 0 : index
    %c0_18 = arith.constant 0 : index
    %30 = vector.load %arg5[%c0_17, %c0_18] : memref<8x128xf32, #tpu.memory_space<vmem>>, vector<8x128xf32>
    %31 = arith.mulf %22, %30 : vector<8x128xf32>
    %c0_19 = arith.constant 0 : index
    %c0_20 = arith.constant 0 : index
    %32 = vector.load %arg6[%c0_19, %c0_20] : memref<8x128xf32, #tpu.memory_space<vmem>>, vector<8x128xf32>
    %33 = arith.mulf %23, %32 : vector<8x128xf32>
    %34 = arith.addf %31, %33 : vector<8x128xf32>
    %35 = vector.extract_strided_slice %29 {offsets = [0, 0], sizes = [8, 32], strides = [1, 1]} : vector<8x128xf32> to vector<8x32xf32>
    %36 = vector.extract_strided_slice %34 {offsets = [0, 0], sizes = [8, 32], strides = [1, 1]} : vector<8x128xf32> to vector<8x32xf32>
    %37 = vector.extract_strided_slice %24 {offsets = [0, 0], sizes = [8, 32], strides = [1, 1]} : vector<8x128xf32> to vector<8x32xf32>
    %cst_21 = arith.constant dense<0.000000e+00> : vector<8x8xf32>
    %38 = tpu.matmul %35, %36, %cst_21 {dimension_numbers = #tpu.dot_dimension_numbers<[1], [1], [0], [0], [0, 0, 1, 0], [], []>} : vector<8x32xf32>, vector<8x32xf32>, vector<8x8xf32> -> vector<8x8xf32>
    %39 = arith.addf %38, %3 : vector<8x8xf32>
    %cst_22 = arith.constant dense<0xFF800000> : vector<8xf32>
    %40 = vector.multi_reduction <maximumf>, %39, %cst_22 [1] : vector<8x8xf32> to vector<8xf32>
    %41 = vector.shape_cast %40 : vector<8xf32> to vector<8x1xf32>
    %42 = vector.broadcast %41 : vector<8x1xf32> to vector<8x8xf32>
    %43 = arith.subf %39, %42 : vector<8x8xf32>
    %44 = math.exp %43 : vector<8x8xf32>
    %cst_23 = arith.constant dense<0.000000e+00> : vector<8xf32>
    %45 = vector.multi_reduction <add>, %44, %cst_23 [1] : vector<8x8xf32> to vector<8xf32>
    %46 = vector.shape_cast %45 : vector<8xf32> to vector<8x1xf32>
    %47 = tpu.reciprocal %46 {approx = true} : vector<8x1xf32> -> vector<8x1xf32>
    %48 = vector.broadcast %47 : vector<8x1xf32> to vector<8x8xf32>
    %49 = arith.mulf %44, %48 : vector<8x8xf32>
    %cst_24 = arith.constant dense<0.000000e+00> : vector<8x32xf32>
    %50 = tpu.matmul %49, %37, %cst_24 {dimension_numbers = #tpu.dot_dimension_numbers<[1], [0], [0], [1], [0, 0, 1, 1], [], []>} : vector<8x8xf32>, vector<8x32xf32>, vector<8x32xf32> -> vector<8x32xf32>
    %51 = arith.truncf %50 : vector<8x32xf32> to vector<8x32xbf16>
    %c0_25 = arith.constant 0 : index
    %c0_26 = arith.constant 0 : index
    %52 = vector.load %arg10[%c0_25, %c0_26] : memref<128x128xbf16, #tpu.memory_space<vmem>>, vector<32x128xbf16>
    %cst_27 = arith.constant dense<0.000000e+00> : vector<8x128xf32>
    %53 = tpu.matmul %51, %52, %cst_27 {dimension_numbers = #tpu.dot_dimension_numbers<[1], [0], [0], [1], [0, 0, 1, 1], [], []>} : vector<8x32xbf16>, vector<32x128xbf16>, vector<8x128xf32> -> vector<8x128xf32>
    %54 = arith.addf %1, %53 : vector<8x128xf32>
    %55 = vector.extract_strided_slice %29 {offsets = [0, 32], sizes = [8, 32], strides = [1, 1]} : vector<8x128xf32> to vector<8x32xf32>
    %56 = vector.extract_strided_slice %34 {offsets = [0, 32], sizes = [8, 32], strides = [1, 1]} : vector<8x128xf32> to vector<8x32xf32>
    %57 = vector.extract_strided_slice %24 {offsets = [0, 32], sizes = [8, 32], strides = [1, 1]} : vector<8x128xf32> to vector<8x32xf32>
    %cst_28 = arith.constant dense<0.000000e+00> : vector<8x8xf32>
    %58 = tpu.matmul %55, %56, %cst_28 {dimension_numbers = #tpu.dot_dimension_numbers<[1], [1], [0], [0], [0, 0, 1, 0], [], []>} : vector<8x32xf32>, vector<8x32xf32>, vector<8x8xf32> -> vector<8x8xf32>
    %59 = arith.addf %58, %3 : vector<8x8xf32>
    %cst_29 = arith.constant dense<0xFF800000> : vector<8xf32>
    %60 = vector.multi_reduction <maximumf>, %59, %cst_29 [1] : vector<8x8xf32> to vector<8xf32>
    %61 = vector.shape_cast %60 : vector<8xf32> to vector<8x1xf32>
    %62 = vector.broadcast %61 : vector<8x1xf32> to vector<8x8xf32>
    %63 = arith.subf %59, %62 : vector<8x8xf32>
    %64 = math.exp %63 : vector<8x8xf32>
    %cst_30 = arith.constant dense<0.000000e+00> : vector<8xf32>
    %65 = vector.multi_reduction <add>, %64, %cst_30 [1] : vector<8x8xf32> to vector<8xf32>
    %66 = vector.shape_cast %65 : vector<8xf32> to vector<8x1xf32>
    %67 = tpu.reciprocal %66 {approx = true} : vector<8x1xf32> -> vector<8x1xf32>
    %68 = vector.broadcast %67 : vector<8x1xf32> to vector<8x8xf32>
    %69 = arith.mulf %64, %68 : vector<8x8xf32>
    %cst_31 = arith.constant dense<0.000000e+00> : vector<8x32xf32>
    %70 = tpu.matmul %69, %57, %cst_31 {dimension_numbers = #tpu.dot_dimension_numbers<[1], [0], [0], [1], [0, 0, 1, 1], [], []>} : vector<8x8xf32>, vector<8x32xf32>, vector<8x32xf32> -> vector<8x32xf32>
    %71 = arith.truncf %70 : vector<8x32xf32> to vector<8x32xbf16>
    %c32 = arith.constant 32 : index
    %c0_32 = arith.constant 0 : index
    %72 = vector.load %arg10[%c32, %c0_32] : memref<128x128xbf16, #tpu.memory_space<vmem>>, vector<32x128xbf16>
    %cst_33 = arith.constant dense<0.000000e+00> : vector<8x128xf32>
    %73 = tpu.matmul %71, %72, %cst_33 {dimension_numbers = #tpu.dot_dimension_numbers<[1], [0], [0], [1], [0, 0, 1, 1], [], []>} : vector<8x32xbf16>, vector<32x128xbf16>, vector<8x128xf32> -> vector<8x128xf32>
    %74 = arith.addf %54, %73 : vector<8x128xf32>
    %75 = vector.extract_strided_slice %29 {offsets = [0, 64], sizes = [8, 32], strides = [1, 1]} : vector<8x128xf32> to vector<8x32xf32>
    %76 = vector.extract_strided_slice %34 {offsets = [0, 64], sizes = [8, 32], strides = [1, 1]} : vector<8x128xf32> to vector<8x32xf32>
    %77 = vector.extract_strided_slice %24 {offsets = [0, 64], sizes = [8, 32], strides = [1, 1]} : vector<8x128xf32> to vector<8x32xf32>
    %cst_34 = arith.constant dense<0.000000e+00> : vector<8x8xf32>
    %78 = tpu.matmul %75, %76, %cst_34 {dimension_numbers = #tpu.dot_dimension_numbers<[1], [1], [0], [0], [0, 0, 1, 0], [], []>} : vector<8x32xf32>, vector<8x32xf32>, vector<8x8xf32> -> vector<8x8xf32>
    %79 = arith.addf %78, %3 : vector<8x8xf32>
    %cst_35 = arith.constant dense<0xFF800000> : vector<8xf32>
    %80 = vector.multi_reduction <maximumf>, %79, %cst_35 [1] : vector<8x8xf32> to vector<8xf32>
    %81 = vector.shape_cast %80 : vector<8xf32> to vector<8x1xf32>
    %82 = vector.broadcast %81 : vector<8x1xf32> to vector<8x8xf32>
    %83 = arith.subf %79, %82 : vector<8x8xf32>
    %84 = math.exp %83 : vector<8x8xf32>
    %cst_36 = arith.constant dense<0.000000e+00> : vector<8xf32>
    %85 = vector.multi_reduction <add>, %84, %cst_36 [1] : vector<8x8xf32> to vector<8xf32>
    %86 = vector.shape_cast %85 : vector<8xf32> to vector<8x1xf32>
    %87 = tpu.reciprocal %86 {approx = true} : vector<8x1xf32> -> vector<8x1xf32>
    %88 = vector.broadcast %87 : vector<8x1xf32> to vector<8x8xf32>
    %89 = arith.mulf %84, %88 : vector<8x8xf32>
    %cst_37 = arith.constant dense<0.000000e+00> : vector<8x32xf32>
    %90 = tpu.matmul %89, %77, %cst_37 {dimension_numbers = #tpu.dot_dimension_numbers<[1], [0], [0], [1], [0, 0, 1, 1], [], []>} : vector<8x8xf32>, vector<8x32xf32>, vector<8x32xf32> -> vector<8x32xf32>
    %91 = arith.truncf %90 : vector<8x32xf32> to vector<8x32xbf16>
    %c64 = arith.constant 64 : index
    %c0_38 = arith.constant 0 : index
    %92 = vector.load %arg10[%c64, %c0_38] : memref<128x128xbf16, #tpu.memory_space<vmem>>, vector<32x128xbf16>
    %cst_39 = arith.constant dense<0.000000e+00> : vector<8x128xf32>
    %93 = tpu.matmul %91, %92, %cst_39 {dimension_numbers = #tpu.dot_dimension_numbers<[1], [0], [0], [1], [0, 0, 1, 1], [], []>} : vector<8x32xbf16>, vector<32x128xbf16>, vector<8x128xf32> -> vector<8x128xf32>
    %94 = arith.addf %74, %93 : vector<8x128xf32>
    %95 = vector.extract_strided_slice %29 {offsets = [0, 96], sizes = [8, 32], strides = [1, 1]} : vector<8x128xf32> to vector<8x32xf32>
    %96 = vector.extract_strided_slice %34 {offsets = [0, 96], sizes = [8, 32], strides = [1, 1]} : vector<8x128xf32> to vector<8x32xf32>
    %97 = vector.extract_strided_slice %24 {offsets = [0, 96], sizes = [8, 32], strides = [1, 1]} : vector<8x128xf32> to vector<8x32xf32>
    %cst_40 = arith.constant dense<0.000000e+00> : vector<8x8xf32>
    %98 = tpu.matmul %95, %96, %cst_40 {dimension_numbers = #tpu.dot_dimension_numbers<[1], [1], [0], [0], [0, 0, 1, 0], [], []>} : vector<8x32xf32>, vector<8x32xf32>, vector<8x8xf32> -> vector<8x8xf32>
    %99 = arith.addf %98, %3 : vector<8x8xf32>
    %cst_41 = arith.constant dense<0xFF800000> : vector<8xf32>
    %100 = vector.multi_reduction <maximumf>, %99, %cst_41 [1] : vector<8x8xf32> to vector<8xf32>
    %101 = vector.shape_cast %100 : vector<8xf32> to vector<8x1xf32>
    %102 = vector.broadcast %101 : vector<8x1xf32> to vector<8x8xf32>
    %103 = arith.subf %99, %102 : vector<8x8xf32>
    %104 = math.exp %103 : vector<8x8xf32>
    %cst_42 = arith.constant dense<0.000000e+00> : vector<8xf32>
    %105 = vector.multi_reduction <add>, %104, %cst_42 [1] : vector<8x8xf32> to vector<8xf32>
    %106 = vector.shape_cast %105 : vector<8xf32> to vector<8x1xf32>
    %107 = tpu.reciprocal %106 {approx = true} : vector<8x1xf32> -> vector<8x1xf32>
    %108 = vector.broadcast %107 : vector<8x1xf32> to vector<8x8xf32>
    %109 = arith.mulf %104, %108 : vector<8x8xf32>
    %cst_43 = arith.constant dense<0.000000e+00> : vector<8x32xf32>
    %110 = tpu.matmul %109, %97, %cst_43 {dimension_numbers = #tpu.dot_dimension_numbers<[1], [0], [0], [1], [0, 0, 1, 1], [], []>} : vector<8x8xf32>, vector<8x32xf32>, vector<8x32xf32> -> vector<8x32xf32>
    %111 = arith.truncf %110 : vector<8x32xf32> to vector<8x32xbf16>
    %c96 = arith.constant 96 : index
    %c0_44 = arith.constant 0 : index
    %112 = vector.load %arg10[%c96, %c0_44] : memref<128x128xbf16, #tpu.memory_space<vmem>>, vector<32x128xbf16>
    %cst_45 = arith.constant dense<0.000000e+00> : vector<8x128xf32>
    %113 = tpu.matmul %111, %112, %cst_45 {dimension_numbers = #tpu.dot_dimension_numbers<[1], [0], [0], [1], [0, 0, 1, 1], [], []>} : vector<8x32xbf16>, vector<32x128xbf16>, vector<8x128xf32> -> vector<8x128xf32>
    %114 = arith.addf %94, %113 : vector<8x128xf32>
    %115 = arith.mulf %114, %114 : vector<8x128xf32>
    %cst_46 = arith.constant dense<0.000000e+00> : vector<8xf32>
    %116 = vector.multi_reduction <add>, %115, %cst_46 [1] : vector<8x128xf32> to vector<8xf32>
    %117 = vector.shape_cast %116 : vector<8xf32> to vector<8x1xf32>
    %cst_47 = arith.constant 1.280000e+02 : f32
    %118 = vector.broadcast %cst_47 : f32 to vector<8x1xf32>
    %119 = arith.divf %117, %118 : vector<8x1xf32>
    %cst_48 = arith.constant 9.99999997E-7 : f32
    %120 = vector.broadcast %cst_48 : f32 to vector<8x1xf32>
    %121 = arith.addf %119, %120 : vector<8x1xf32>
    %122 = math.rsqrt %121 : vector<8x1xf32>
    %123 = vector.broadcast %122 : vector<8x1xf32> to vector<8x128xf32>
    %124 = arith.mulf %114, %123 : vector<8x128xf32>
    %c0_49 = arith.constant 0 : index
    %c0_50 = arith.constant 0 : index
    %125 = vector.load %arg8[%c0_49, %c0_50] : memref<1x128xf32, #tpu.memory_space<vmem>>, vector<1x128xf32>
    %126 = vector.broadcast %125 : vector<1x128xf32> to vector<8x128xf32>
    %127 = arith.mulf %124, %126 : vector<8x128xf32>
    %128 = arith.truncf %127 : vector<8x128xf32> to vector<8x128xbf16>
    %c0_51 = arith.constant 0 : index
    %c0_52 = arith.constant 0 : index
    %129 = vector.load %arg11[%c0_51, %c0_52] : memref<128x1024xbf16, #tpu.memory_space<vmem>>, vector<128x1024xbf16>
    %cst_53 = arith.constant dense<0.000000e+00> : vector<8x1024xf32>
    %130 = tpu.matmul %128, %129, %cst_53 {dimension_numbers = #tpu.dot_dimension_numbers<[1], [0], [0], [1], [0, 0, 1, 1], [], []>} : vector<8x128xbf16>, vector<128x1024xbf16>, vector<8x1024xf32> -> vector<8x1024xf32>
    %131 = vector.extract_strided_slice %130 {offsets = [0, 0], sizes = [8, 512], strides = [1, 1]} : vector<8x1024xf32> to vector<8x512xf32>
    %132 = vector.extract_strided_slice %130 {offsets = [0, 512], sizes = [8, 512], strides = [1, 1]} : vector<8x1024xf32> to vector<8x512xf32>
    %133 = arith.negf %131 : vector<8x512xf32>
    %134 = math.exp %133 : vector<8x512xf32>
    %cst_54 = arith.constant 1.000000e+00 : f32
    %135 = vector.broadcast %cst_54 : f32 to vector<8x512xf32>
    %136 = arith.addf %135, %134 : vector<8x512xf32>
    %137 = arith.divf %135, %136 : vector<8x512xf32>
    %138 = arith.mulf %131, %137 : vector<8x512xf32>
    %139 = arith.mulf %138, %132 : vector<8x512xf32>
    %140 = arith.truncf %139 : vector<8x512xf32> to vector<8x512xbf16>
    %c0_55 = arith.constant 0 : index
    %c0_56 = arith.constant 0 : index
    %141 = vector.load %arg12[%c0_55, %c0_56] : memref<512x128xbf16, #tpu.memory_space<vmem>>, vector<512x128xbf16>
    %cst_57 = arith.constant dense<0.000000e+00> : vector<8x128xf32>
    %142 = tpu.matmul %140, %141, %cst_57 {dimension_numbers = #tpu.dot_dimension_numbers<[1], [0], [0], [1], [0, 0, 1, 1], [], []>} : vector<8x512xbf16>, vector<512x128xbf16>, vector<8x128xf32> -> vector<8x128xf32>
    %143 = arith.addf %114, %142 : vector<8x128xf32>
    %c0_58 = arith.constant 0 : index
    %c0_59 = arith.constant 0 : index
    %c0_60 = arith.constant 0 : index
    %144 = vector.load %arg13[%c0_58, %c0_59, %c0_60] : memref<1x8x128xf32, #tpu.memory_space<vmem>>, vector<1x8x128xf32>
    %145 = vector.shape_cast %144 : vector<1x8x128xf32> to vector<8x128xf32>
    %146 = vector.shape_cast %143 : vector<8x128xf32> to vector<1x8x128xf32>
    tpu.vector_store %arg13[%c0_58, %c0_59, %c0_60], %146 {strides = array<i32>} : memref<1x8x128xf32, #tpu.memory_space<vmem>>, vector<1x8x128xf32>,
    return
  }
  func.func @transform_0(%arg0: i32) -> (i32, i32, i32) {
    %c0_i32 = arith.constant 0 : i32
    %c0_i32_0 = arith.constant 0 : i32
    %c0_i32_1 = arith.constant 0 : i32
    return %arg0, %c0_i32, %c0_i32_0 : i32, i32, i32
  }
  func.func @transform_1(%arg0: i32) -> (i32, i32, i32, i32) {
    %c0_i32 = arith.constant 0 : i32
    %c0_i32_0 = arith.constant 0 : i32
    %c0_i32_1 = arith.constant 0 : i32
    %c0_i32_2 = arith.constant 0 : i32
    return %arg0, %c0_i32, %c0_i32_0, %c0_i32_1 : i32, i32, i32, i32
  }
  func.func @transform_2(%arg0: i32) -> (i32, i32) {
    %c0_i32 = arith.constant 0 : i32
    %c0_i32_0 = arith.constant 0 : i32
    %c0_i32_1 = arith.constant 0 : i32
    return %c0_i32, %c0_i32_0 : i32, i32
  }
  func.func @transform_3(%arg0: i32) -> (i32, i32) {
    %c0_i32 = arith.constant 0 : i32
    %c0_i32_0 = arith.constant 0 : i32
    %c0_i32_1 = arith.constant 0 : i32
    return %c0_i32, %c0_i32_0 : i32, i32
  }
  func.func @transform_4(%arg0: i32) -> (i32, i32) {
    %c0_i32 = arith.constant 0 : i32
    %c0_i32_0 = arith.constant 0 : i32
    %c0_i32_1 = arith.constant 0 : i32
    return %c0_i32, %c0_i32_0 : i32, i32
  }
  func.func @transform_5(%arg0: i32) -> (i32, i32) {
    %c0_i32 = arith.constant 0 : i32
    %c0_i32_0 = arith.constant 0 : i32
    %c0_i32_1 = arith.constant 0 : i32
    return %c0_i32, %c0_i32_0 : i32, i32
  }
  func.func @transform_6(%arg0: i32) -> (i32, i32) {
    %c0_i32 = arith.constant 0 : i32
    %c0_i32_0 = arith.constant 0 : i32
    %c0_i32_1 = arith.constant 0 : i32
    return %c0_i32, %c0_i32_0 : i32, i32
  }
  func.func @transform_7(%arg0: i32) -> (i32, i32) {
    %c0_i32 = arith.constant 0 : i32
    %c0_i32_0 = arith.constant 0 : i32
    %c0_i32_1 = arith.constant 0 : i32
    return %c0_i32, %c0_i32_0 : i32, i32
  }
  func.func @transform_8(%arg0: i32) -> (i32, i32) {
    %c0_i32 = arith.constant 0 : i32
    %c0_i32_0 = arith.constant 0 : i32
    %c0_i32_1 = arith.constant 0 : i32
    return %c0_i32, %c0_i32_0 : i32, i32
  }
  func.func @transform_9(%arg0: i32) -> (i32, i32) {
    %c0_i32 = arith.constant 0 : i32
    %c0_i32_0 = arith.constant 0 : i32
    %c0_i32_1 = arith.constant 0 : i32
    return %c0_i32, %c0_i32_0 : i32, i32
  }
  func.func @transform_10(%arg0: i32) -> (i32, i32) {
    %c0_i32 = arith.constant 0 : i32
    %c0_i32_0 = arith.constant 0 : i32
    %c0_i32_1 = arith.constant 0 : i32
    return %c0_i32, %c0_i32_0 : i32, i32
  }
  func.func @transform_11(%arg0: i32) -> (i32, i32) {
    %c0_i32 = arith.constant 0 : i32
    %c0_i32_0 = arith.constant 0 : i32
    %c0_i32_1 = arith.constant 0 : i32
    return %c0_i32, %c0_i32_0 : i32, i32
  }
  func.func @transform_12(%arg0: i32) -> (i32, i32, i32) {
    %c0_i32 = arith.constant 0 : i32
    %c0_i32_0 = arith.constant 0 : i32
    %c0_i32_1 = arith.constant 0 : i32
    return %arg0, %c0_i32, %c0_i32_0 : i32, i32, i32
  }
}

</mosaic_0001>

<llo_original>
// kernel: decoder_layer.1
$region0: #{decoder_layer.1}
  #allocation0 [shape = 'u32[]', space=smem, size = 0x4, offset = 0x4, fixed_abs, tag = 'smem constant byte address 0x4 - core index']
  #allocation1 [shape = 'u32[72,128]{1,0:T(1,128)}', space=vmem, size = 0x9000, scoped, tag = 'internal scratch']
  %s0 = inlined_call_operand.vmem [shape: f32[2,8,128], index: 0, kind: input, shape index: {}]
  %s1 = inlined_call_operand.vmem [shape: f32[2,1,8,8], index: 1, kind: input, shape index: {}]
  %s2 = inlined_call_operand.vmem [shape: f32[8,128], index: 2, kind: input, shape index: {}]
  %s3 = inlined_call_operand.vmem [shape: f32[8,128], index: 3, kind: input, shape index: {}]
  %s4 = inlined_call_operand.vmem [shape: f32[8,128], index: 4, kind: input, shape index: {}]
  %s5 = inlined_call_operand.vmem [shape: f32[8,128], index: 5, kind: input, shape index: {}]
  %s6 = inlined_call_operand.vmem [shape: f32[1,128], index: 6, kind: input, shape index: {}]
  %s7 = inlined_call_operand.vmem [shape: f32[1,128], index: 7, kind: input, shape index: {}]
  %s8 = inlined_call_operand.hbm [shape: bf16[128,640], index: 8, kind: input, shape index: {}]
  %s9 = inlined_call_operand.vmem [shape: bf16[128,128], index: 9, kind: input, shape index: {}]
  %s10 = inlined_call_operand.hbm [shape: bf16[128,1024], index: 10, kind: input, shape index: {}]
  %s11 = inlined_call_operand.hbm [shape: bf16[512,128], index: 11, kind: input, shape index: {}]
  %s12 = inlined_call_operand.hbm [shape: f32[2,8,128], index: 12, kind: output, shape index: {}]
  %s13 = sld [smem:[#allocation0]]
  $region93: #{decoder_layer.1} parent=0
    _
  %s15 = ssub.s32 1, %s13
  %s16 = scalar_select 0, %s15, %s13
  $region1: #{decoder_layer.1} parent=0
    #allocation2 [shape = 'u8[163840]{0}', space=vmem, size = 0x28000, scoped, tag = 'input window, operand 8, single buffered']
    #allocation3 [shape = 's32[2]{0}', space=sflag, size = 0x8, scoped, tag = 'scoped memory for decoder_layer.1']
    #allocation4 [shape = 's32[2]{0}', space=sflag, size = 0x8, scoped, tag = 'scoped memory for decoder_layer.1']
    #allocation5 [shape = 'u8[262144]{0}', space=vmem, size = 0x40000, scoped, tag = 'input window, operand 10, single buffered']
    #allocation6 [shape = 's32[1]{0}', space=sflag, size = 0x4, scoped, tag = 'scoped memory for decoder_layer.1']
    #allocation7 [shape = 'u8[131072]{0}', space=vmem, size = 0x20000, scoped, tag = 'input window, operand 11, single buffered']
    #allocation8 [shape = 'u8[8192]{0}', space=vmem, size = 0x2000, scoped, tag = 'output window, operand 0']
    %17 = vsyncpa [#allocation3], 0
    %18 = vsyncpa [#allocation6], 0
    %19 = vsyncpa [#allocation4], 0
    %s20 = scalar_lea.sflag [#allocation4], 1
    %21 = vsyncpa %s20, 0
    loop: start=0, step=1, limit=4
    $region2: #{decoder_layer.1} parent=1 // loop_pre_header
      _
    $region3: #{decoder_layer.1} parent=1 // loop_header
      %s23 = sphi 0, %s27
      %p24 = scmp.ge.s32.totalorder %s23, 4
      %s33 = sphi 0, %s35
      %s36 = sphi 0, %s33
      %s37 = sphi 0, %s36
      %s53 = sphi 0, %s37
      %s59 = sphi 0, %s61
      %s62 = sphi 0, %s59
      %s63 = sphi 0, %s62
      %s79 = sphi 0, %s63
      %s83 = sphi 0, %s83
      %s85 = sphi 0, %s83
      %s86 = sphi 0, %s85
      %s100 = sphi 0, %s86
      %s104 = sphi 0, %s104
      %s106 = sphi 0, %s104
      %s107 = sphi 0, %s106
      %s121 = sphi 0, %s107
      %s125 = sphi 0, %s125
      %s127 = sphi 0, %s125
      %s128 = sphi 0, %s127
      %s142 = sphi 0, %s128
      %s146 = sphi 0, %s146
      %s148 = sphi 0, %s146
      %s149 = sphi 0, %s148
      %s163 = sphi 0, %s149
      %s167 = sphi 0, %s167
      %s169 = sphi 0, %s167
      %s170 = sphi 0, %s169
      %s184 = sphi 0, %s170
      %s188 = sphi 0, %s188
      %s190 = sphi 0, %s188
      %s191 = sphi 0, %s190
      %s205 = sphi 0, %s191
      %s209 = sphi 0, %s209
      %s211 = sphi 0, %s209
      %s212 = sphi 0, %s211
      %s226 = sphi 0, %s212
      %s230 = sphi 0, %s230
      %s232 = sphi 0, %s230
      %s233 = sphi 0, %s232
      %s247 = sphi 0, %s233
      %s251 = sphi 0, %s251
      %s253 = sphi 0, %s251
      %s254 = sphi 0, %s253
      %s268 = sphi 0, %s254
      %s272 = sphi 0, %s272
      %s274 = sphi 0, %s272
      %s275 = sphi 0, %s274
      %s289 = sphi 0, %s275
      %s295 = sphi 0, %s297
      %s298 = sphi 0, %s295
      %s299 = sphi 0, %s298
      %s315 = sphi 0, %s299
    $region4: #{decoder_layer.1} parent=1 // loop_header_branch
      %26 = sbr.rel (%p24) target = $region8
    $region5: #{decoder_layer.1} parent=1 // loop_body
      %s28 = ssub.s32 %s23, 1
      %s29 = ssub.s32 %s23, 2
      %s30 = sadd.s32 %s23, 1
      %s31 = ssub.s32 %s23, %s30
      %p32 = scmp.eq.s32.totalorder %s31, 0
      %s34 = sadd.s32 %s33, 1
      %s35 = scalar_select %p32, %s33, %s34
      %p38 = pneg %p32
      %p39 = scmp.eq.s32.totalorder %s23, 1
      %p40 = por %p38, %p39
      %p41 = scmp.ne.s32.totalorder %s33, %s36
      %p42 = scmp.eq.s32.totalorder %s23, 0
      %p43 = por %p41, %p42
      %p44 = scmp.ne.s32.totalorder %s33, %s36
      %p45 = scmp.eq.s32.totalorder %s28, 1
      %p46 = por %p44, %p45
      %p47 = scmp.ne.s32.totalorder %s36, %s37
      %p48 = scmp.eq.s32.totalorder %s28, 0
      %p49 = por %p47, %p48
      %p50 = scmp.ne.s32.totalorder %s36, %s37
      %p51 = scmp.eq.s32.totalorder %s29, 1
      %p52 = por %p50, %p51
      %p54 = scmp.ne.s32.totalorder %s37, %s53
      %p55 = scmp.eq.s32.totalorder %s29, 0
      %p56 = por %p54, %p55
      %s57 = ssub.s32 %s23, %s30
      %p58 = scmp.eq.s32.totalorder %s57, 0
      %s60 = sadd.s32 %s59, 1
      %s61 = scalar_select %p58, %s59, %s60
      %p64 = pneg %p58
      %p65 = scmp.eq.s32.totalorder %s23, 1
      %p66 = por %p64, %p65
      %p67 = scmp.ne.s32.totalorder %s59, %s62
      %p68 = scmp.eq.s32.totalorder %s23, 0
      %p69 = por %p67, %p68
      %p70 = scmp.ne.s32.totalorder %s59, %s62
      %p71 = scmp.eq.s32.totalorder %s28, 1
      %p72 = por %p70, %p71
      %p73 = scmp.ne.s32.totalorder %s62, %s63
      %p74 = scmp.eq.s32.totalorder %s28, 0
      %p75 = por %p73, %p74
      %p76 = scmp.ne.s32.totalorder %s62, %s63
      %p77 = scmp.eq.s32.totalorder %s29, 1
      %p78 = por %p76, %p77
      %p80 = scmp.ne.s32.totalorder %s63, %s79
      %p81 = scmp.eq.s32.totalorder %s29, 0
      %p82 = por %p80, %p81
      %s84 = sadd.s32 %s83, 1
      %p87 = scmp.eq.s32.totalorder %s23, 1
      %p88 = scmp.ne.s32.totalorder %s83, %s85
      %p89 = scmp.eq.s32.totalorder %s23, 0
      %p90 = por %p88, %p89
      %p91 = scmp.ne.s32.totalorder %s83, %s85
      %p92 = scmp.eq.s32.totalorder %s28, 1
      %p93 = por %p91, %p92
      %p94 = scmp.ne.s32.totalorder %s85, %s86
      %p95 = scmp.eq.s32.totalorder %s28, 0
      %p96 = por %p94, %p95
      %p97 = scmp.ne.s32.totalorder %s85, %s86
      %p98 = scmp.eq.s32.totalorder %s29, 1
      %p99 = por %p97, %p98
      %p101 = scmp.ne.s32.totalorder %s86, %s100
      %p102 = scmp.eq.s32.totalorder %s29, 0
      %p103 = por %p101, %p102
      %s105 = sadd.s32 %s104, 1
      %p108 = scmp.eq.s32.totalorder %s23, 1
      %p109 = scmp.ne.s32.totalorder %s104, %s106
      %p110 = scmp.eq.s32.totalorder %s23, 0
      %p111 = por %p109, %p110
      %p112 = scmp.ne.s32.totalorder %s104, %s106
      %p113 = scmp.eq.s32.totalorder %s28, 1
      %p114 = por %p112, %p113
      %p115 = scmp.ne.s32.totalorder %s106, %s107
      %p116 = scmp.eq.s32.totalorder %s28, 0
      %p117 = por %p115, %p116
      %p118 = scmp.ne.s32.totalorder %s106, %s107
      %p119 = scmp.eq.s32.totalorder %s29, 1
      %p120 = por %p118, %p119
      %p122 = scmp.ne.s32.totalorder %s107, %s121
      %p123 = scmp.eq.s32.totalorder %s29, 0
      %p124 = por %p122, %p123
      %s126 = sadd.s32 %s125, 1
      %p129 = scmp.eq.s32.totalorder %s23, 1
      %p130 = scmp.ne.s32.totalorder %s125, %s127
      %p131 = scmp.eq.s32.totalorder %s23, 0
      %p132 = por %p130, %p131
      %p133 = scmp.ne.s32.totalorder %s125, %s127
      %p134 = scmp.eq.s32.totalorder %s28, 1
      %p135 = por %p133, %p134
      %p136 = scmp.ne.s32.totalorder %s127, %s128
      %p137 = scmp.eq.s32.totalorder %s28, 0
      %p138 = por %p136, %p137
      %p139 = scmp.ne.s32.totalorder %s127, %s128
      %p140 = scmp.eq.s32.totalorder %s29, 1
      %p141 = por %p139, %p140
      %p143 = scmp.ne.s32.totalorder %s128, %s142
      %p144 = scmp.eq.s32.totalorder %s29, 0
      %p145 = por %p143, %p144
      %s147 = sadd.s32 %s146, 1
      %p150 = scmp.eq.s32.totalorder %s23, 1
      %p151 = scmp.ne.s32.totalorder %s146, %s148
      %p152 = scmp.eq.s32.totalorder %s23, 0
      %p153 = por %p151, %p152
      %p154 = scmp.ne.s32.totalorder %s146, %s148
      %p155 = scmp.eq.s32.totalorder %s28, 1
      %p156 = por %p154, %p155
      %p157 = scmp.ne.s32.totalorder %s148, %s149
      %p158 = scmp.eq.s32.totalorder %s28, 0
      %p159 = por %p157, %p158
      %p160 = scmp.ne.s32.totalorder %s148, %s149
      %p161 = scmp.eq.s32.totalorder %s29, 1
      %p162 = por %p160, %p161
      %p164 = scmp.ne.s32.totalorder %s149, %s163
      %p165 = scmp.eq.s32.totalorder %s29, 0
      %p166 = por %p164, %p165
      %s168 = sadd.s32 %s167, 1
      %p171 = scmp.eq.s32.totalorder %s23, 1
      %p172 = scmp.ne.s32.totalorder %s167, %s169
      %p173 = scmp.eq.s32.totalorder %s23, 0
      %p174 = por %p172, %p173
      %p175 = scmp.ne.s32.totalorder %s167, %s169
      %p176 = scmp.eq.s32.totalorder %s28, 1
      %p177 = por %p175, %p176
      %p178 = scmp.ne.s32.totalorder %s169, %s170
      %p179 = scmp.eq.s32.totalorder %s28, 0
      %p180 = por %p178, %p179
      %p181 = scmp.ne.s32.totalorder %s169, %s170
      %p182 = scmp.eq.s32.totalorder %s29, 1
      %p183 = por %p181, %p182
      %p185 = scmp.ne.s32.totalorder %s170, %s184
      %p186 = scmp.eq.s32.totalorder %s29, 0
      %p187 = por %p185, %p186
      %s189 = sadd.s32 %s188, 1
      %p192 = scmp.eq.s32.totalorder %s23, 1
      %p193 = scmp.ne.s32.totalorder %s188, %s190
      %p194 = scmp.eq.s32.totalorder %s23, 0
      %p195 = por %p193, %p194
      %p196 = scmp.ne.s32.totalorder %s188, %s190
      %p197 = scmp.eq.s32.totalorder %s28, 1
      %p198 = por %p196, %p197
      %p199 = scmp.ne.s32.totalorder %s190, %s191
      %p200 = scmp.eq.s32.totalorder %s28, 0
      %p201 = por %p199, %p200
      %p202 = scmp.ne.s32.totalorder %s190, %s191
      %p203 = scmp.eq.s32.totalorder %s29, 1
      %p204 = por %p202, %p203
      %p206 = scmp.ne.s32.totalorder %s191, %s205
      %p207 = scmp.eq.s32.totalorder %s29, 0
      %p208 = por %p206, %p207
      %s210 = sadd.s32 %s209, 1
      %p213 = scmp.eq.s32.totalorder %s23, 1
      %p214 = scmp.ne.s32.totalorder %s209, %s211
      %p215 = scmp.eq.s32.totalorder %s23, 0
      %p216 = por %p214, %p215
      %p217 = scmp.ne.s32.totalorder %s209, %s211
      %p218 = scmp.eq.s32.totalorder %s28, 1
      %p219 = por %p217, %p218
      %p220 = scmp.ne.s32.totalorder %s211, %s212
      %p221 = scmp.eq.s32.totalorder %s28, 0
      %p222 = por %p220, %p221
      %p223 = scmp.ne.s32.totalorder %s211, %s212
      %p224 = scmp.eq.s32.totalorder %s29, 1
      %p225 = por %p223, %p224
      %p227 = scmp.ne.s32.totalorder %s212, %s226
      %p228 = scmp.eq.s32.totalorder %s29, 0
      %p229 = por %p227, %p228
      %s231 = sadd.s32 %s230, 1
      %p234 = scmp.eq.s32.totalorder %s23, 1
      %p235 = scmp.ne.s32.totalorder %s230, %s232
      %p236 = scmp.eq.s32.totalorder %s23, 0
      %p237 = por %p235, %p236
      %p238 = scmp.ne.s32.totalorder %s230, %s232
      %p239 = scmp.eq.s32.totalorder %s28, 1
      %p240 = por %p238, %p239
      %p241 = scmp.ne.s32.totalorder %s232, %s233
      %p242 = scmp.eq.s32.totalorder %s28, 0
      %p243 = por %p241, %p242
      %p244 = scmp.ne.s32.totalorder %s232, %s233
      %p245 = scmp.eq.s32.totalorder %s29, 1
      %p246 = por %p244, %p245
      %p248 = scmp.ne.s32.totalorder %s233, %s247
      %p249 = scmp.eq.s32.totalorder %s29, 0
      %p250 = por %p248, %p249
      %s252 = sadd.s32 %s251, 1
      %p255 = scmp.eq.s32.totalorder %s23, 1
      %p256 = scmp.ne.s32.totalorder %s251, %s253
      %p257 = scmp.eq.s32.totalorder %s23, 0
      %p258 = por %p256, %p257
      %p259 = scmp.ne.s32.totalorder %s251, %s253
      %p260 = scmp.eq.s32.totalorder %s28, 1
      %p261 = por %p259, %p260
      %p262 = scmp.ne.s32.totalorder %s253, %s254
      %p263 = scmp.eq.s32.totalorder %s28, 0
      %p264 = por %p262, %p263
      %p265 = scmp.ne.s32.totalorder %s253, %s254
      %p266 = scmp.eq.s32.totalorder %s29, 1
      %p267 = por %p265, %p266
      %p269 = scmp.ne.s32.totalorder %s254, %s268
      %p270 = scmp.eq.s32.totalorder %s29, 0
      %p271 = por %p269, %p270
      %s273 = sadd.s32 %s272, 1
      %p276 = scmp.eq.s32.totalorder %s23, 1
      %p277 = scmp.ne.s32.totalorder %s272, %s274
      %p278 = scmp.eq.s32.totalorder %s23, 0
      %p279 = por %p277, %p278
      %p280 = scmp.ne.s32.totalorder %s272, %s274
      %p281 = scmp.eq.s32.totalorder %s28, 1
      %p282 = por %p280, %p281
      %p283 = scmp.ne.s32.totalorder %s274, %s275
      %p284 = scmp.eq.s32.totalorder %s28, 0
      %p285 = por %p283, %p284
      %p286 = scmp.ne.s32.totalorder %s274, %s275
      %p287 = scmp.eq.s32.totalorder %s29, 1
      %p288 = por %p286, %p287
      %p290 = scmp.ne.s32.totalorder %s275, %s289
      %p291 = scmp.eq.s32.totalorder %s29, 0
      %p292 = por %p290, %p291
      %s293 = ssub.s32 %s23, %s30
      %p294 = scmp.eq.s32.totalorder %s293, 0
      %s296 = sadd.s32 %s295, 1
      %s297 = scalar_select %p294, %s295, %s296
      %p300 = pneg %p294
      %p301 = scmp.eq.s32.totalorder %s23, 1
      %p302 = por %p300, %p301
      %p303 = scmp.ne.s32.totalorder %s295, %s298
      %p304 = scmp.eq.s32.totalorder %s23, 0
      %p305 = por %p303, %p304
      %p306 = scmp.ne.s32.totalorder %s295, %s298
      %p307 = scmp.eq.s32.totalorder %s28, 1
      %p308 = por %p306, %p307
      %p309 = scmp.ne.s32.totalorder %s298, %s299
      %p310 = scmp.eq.s32.totalorder %s28, 0
      %p311 = por %p309, %p310
      %p312 = scmp.ne.s32.totalorder %s298, %s299
      %p313 = scmp.eq.s32.totalorder %s29, 1
      %p314 = por %p312, %p313
      %p316 = scmp.ne.s32.totalorder %s299, %s315
      %p317 = scmp.eq.s32.totalorder %s29, 0
      %p318 = por %p316, %p317
      %p319 = scmp.le.s32.totalorder 1, %s23
      %p320 = scmp.lt.s32.totalorder %s23, 3
      %p321 = pnand %p319, %p320
      %p322 = pneg %p321
      // Predicated region
      $region9: #{decoder_layer.1} parent=5 // pred_check
        _
      $region10: #{decoder_layer.1} parent=5 // pred_check_branch
        %324 = sbr.rel (%p321) target = $region12
      $region11: #{decoder_layer.1} parent=5 // pred_region
        %s325 = ssub.s32 %s23, 1
        // Predicated region
        $region13: #{decoder_layer.1} parent=11 // pred_check
          %p326 = pneg %p96
        $region14: #{decoder_layer.1} parent=11 // pred_check_branch
          %328 = sbr.rel (%p326) target = $region16
        $region15: #{decoder_layer.1} parent=11 // pred_region
          _
        $region16: #{decoder_layer.1} parent=11 // pred_fallthru
          _
        // Predicated region
        $region17: #{decoder_layer.1} parent=11 // pred_check
          %p329 = pneg %p117
        $region18: #{decoder_layer.1} parent=11 // pred_check_branch
          %331 = sbr.rel (%p329) target = $region20
        $region19: #{decoder_layer.1} parent=11 // pred_region
          _
        $region20: #{decoder_layer.1} parent=11 // pred_fallthru
          _
        // Predicated region
        $region21: #{decoder_layer.1} parent=11 // pred_check
          %p332 = pneg %p138
        $region22: #{decoder_layer.1} parent=11 // pred_check_branch
          %334 = sbr.rel (%p332) target = $region24
        $region23: #{decoder_layer.1} parent=11 // pred_region
          _
        $region24: #{decoder_layer.1} parent=11 // pred_fallthru
          _
        // Predicated region
        $region25: #{decoder_layer.1} parent=11 // pred_check
          %p335 = pneg %p159
        $region26: #{decoder_layer.1} parent=11 // pred_check_branch
          %337 = sbr.rel (%p335) target = $region28
        $region27: #{decoder_layer.1} parent=11 // pred_region
          _
        $region28: #{decoder_layer.1} parent=11 // pred_fallthru
          _
        // Predicated region
        $region29: #{decoder_layer.1} parent=11 // pred_check
          %p338 = pneg %p180
        $region30: #{decoder_layer.1} parent=11 // pred_check_branch
          %340 = sbr.rel (%p338) target = $region32
        $region31: #{decoder_layer.1} parent=11 // pred_region
          _
        $region32: #{decoder_layer.1} parent=11 // pred_fallthru
          _
        // Predicated region
        $region33: #{decoder_layer.1} parent=11 // pred_check
          %p341 = pneg %p201
        $region34: #{decoder_layer.1} parent=11 // pred_check_branch
          %343 = sbr.rel (%p341) target = $region36
        $region35: #{decoder_layer.1} parent=11 // pred_region
          _
        $region36: #{decoder_layer.1} parent=11 // pred_fallthru
          _
        // Predicated region
        $region37: #{decoder_layer.1} parent=11 // pred_check
          %p344 = pneg %p222
        $region38: #{decoder_layer.1} parent=11 // pred_check_branch
          %346 = sbr.rel (%p344) target = $region40
        $region39: #{decoder_layer.1} parent=11 // pred_region
          %348 = vsyncadd [#allocation3], 0
          %s349 = sshll.u32 %s8, 4
          %s350 = int_to_ptr.hbm [resolvable:$true] %s349
          %s351 = sshll.u32 [#allocation2], 4
          %s352 = int_to_ptr.vmem [resolvable:$true] %s351
          %357 = dma.hbm_to_vmem [thread:$0]  %s350, 5120, %s352, [#allocation3], 320, 320, 20
        $region40: #{decoder_layer.1} parent=11 // pred_fallthru
          _
        // Predicated region
        $region41: #{decoder_layer.1} parent=11 // pred_check
          %p358 = pneg %p243
        $region42: #{decoder_layer.1} parent=11 // pred_check_branch
          %360 = sbr.rel (%p358) target = $region44
        $region43: #{decoder_layer.1} parent=11 // pred_region
          _
        $region44: #{decoder_layer.1} parent=11 // pred_fallthru
          _
        // Predicated region
        $region45: #{decoder_layer.1} parent=11 // pred_check
          %p361 = pneg %p264
        $region46: #{decoder_layer.1} parent=11 // pred_check_branch
          %363 = sbr.rel (%p361) target = $region48
        $region47: #{decoder_layer.1} parent=11 // pred_region
          %365 = vsyncadd [#allocation6], 0
          %s366 = sshll.u32 %s10, 4
          %s367 = int_to_ptr.hbm [resolvable:$true] %s366
          %s368 = sshll.u32 [#allocation5], 4
          %s369 = int_to_ptr.vmem [resolvable:$true] %s368
          %374 = dma.hbm_to_vmem [thread:$0]  %s367, 8192, %s369, [#allocation6], 512, 512, 32
        $region48: #{decoder_layer.1} parent=11 // pred_fallthru
          _
        // Predicated region
        $region49: #{decoder_layer.1} parent=11 // pred_check
          %p375 = pneg %p285
        $region50: #{decoder_layer.1} parent=11 // pred_check_branch
          %377 = sbr.rel (%p375) target = $region52
        $region51: #{decoder_layer.1} parent=11 // pred_region
          %379 = vsyncadd [#allocation6], 0
          %s380 = sshll.u32 %s11, 4
          %s381 = int_to_ptr.hbm [resolvable:$true] %s380
          %s382 = sshll.u32 [#allocation7], 4
          %s383 = int_to_ptr.vmem [resolvable:$true] %s382
          %388 = dma.hbm_to_vmem [thread:$0]  %s381, 4096, %s383, [#allocation6], 64, 64, 4
        $region52: #{decoder_layer.1} parent=11 // pred_fallthru
          _
      $region12: #{decoder_layer.1} parent=5 // pred_fallthru
        _
      %p389 = scmp.lt.s32.totalorder %s23, 2
      // Predicated region
      $region53: #{decoder_layer.1} parent=5 // pred_check
        %p390 = pneg %p389
      $region54: #{decoder_layer.1} parent=5 // pred_check_branch
        %392 = sbr.rel (%p390) target = $region56
      $region55: #{decoder_layer.1} parent=5 // pred_region
        // Predicated region
        $region57: #{decoder_layer.1} parent=55 // pred_check
          %p393 = pneg %p43
        $region58: #{decoder_layer.1} parent=55 // pred_check_branch
          %395 = sbr.rel (%p393) target = $region60
        $region59: #{decoder_layer.1} parent=55 // pred_region
          %p396 = scmp.lt.s32.totalorder %s23, 1
          %s397 = scalar_select %p396, %s23, 1
          %s398 = smul.addr %s397, 8
          %s399 = scalar_lea.vmem %s0, %s398
        $region60: #{decoder_layer.1} parent=55 // pred_fallthru
          _
        // Predicated region
        $region61: #{decoder_layer.1} parent=55 // pred_check
          %p400 = pneg %p69
        $region62: #{decoder_layer.1} parent=55 // pred_check_branch
          %402 = sbr.rel (%p400) target = $region64
        $region63: #{decoder_layer.1} parent=55 // pred_region
          %p403 = scmp.lt.s32.totalorder %s23, 1
          %s404 = scalar_select %p403, %s23, 1
          %s405 = smul.addr %s404, 8
          %s406 = scalar_lea.vmem %s1, %s405
        $region64: #{decoder_layer.1} parent=55 // pred_fallthru
          _
      $region56: #{decoder_layer.1} parent=5 // pred_fallthru
        _
      %p407 = scmp.le.s32.totalorder 1, %s23
      %p408 = scmp.lt.s32.totalorder %s23, 3
      %p409 = pnand %p407, %p408
      %p410 = pneg %p409
      // Predicated region
      $region65: #{decoder_layer.1} parent=5 // pred_check
        _
      $region66: #{decoder_layer.1} parent=5 // pred_check_branch
        %412 = sbr.rel (%p409) target = $region68
      $region67: #{decoder_layer.1} parent=5 // pred_region
        %s413 = ssub.s32 %s23, 1
        // Predicated region
        $region69: #{decoder_layer.1} parent=67 // pred_check
          %p414 = pneg %p222
        $region70: #{decoder_layer.1} parent=67 // pred_check_branch
          %416 = sbr.rel (%p414) target = $region72
        $region71: #{decoder_layer.1} parent=67 // pred_region
          %418 = dma.done [#allocation3], 5120
        $region72: #{decoder_layer.1} parent=67 // pred_fallthru
          _
        // Predicated region
        $region73: #{decoder_layer.1} parent=67 // pred_check
          %p419 = pneg %p264
        $region74: #{decoder_layer.1} parent=67 // pred_check_branch
          %421 = sbr.rel (%p419) target = $region76
        $region75: #{decoder_layer.1} parent=67 // pred_region
          %423 = dma.done [#allocation6], 8192
        $region76: #{decoder_layer.1} parent=67 // pred_fallthru
          _
        // Predicated region
        $region77: #{decoder_layer.1} parent=67 // pred_check
          %p424 = pneg %p285
        $region78: #{decoder_layer.1} parent=67 // pred_check_branch
          %426 = sbr.rel (%p424) target = $region80
        $region79: #{decoder_layer.1} parent=67 // pred_region
          %428 = dma.done [#allocation6], 4096
        $region80: #{decoder_layer.1} parent=67 // pred_fallthru
          _
        %p429 = scmp.lt.s32.totalorder %s28, 1
        %s430 = scalar_select %p429, %s28, 1
        %s431 = smul.addr %s430, 8
        %s432 = scalar_lea.vmem %s0, %s431
        %p433 = pneg %p49
        %p434 = pneg %p46
        %p435 = scmp.lt.s32.totalorder %s28, 1
        %s436 = scalar_select %p435, %s28, 1
        %s437 = smul.addr %s436, 8
        %s438 = scalar_lea.vmem %s1, %s437
        %p439 = pneg %p75
        %p440 = pneg %p72
        %p441 = pneg %p96
        %p442 = pneg %p93
        %p443 = pneg %p117
        %p444 = pneg %p114
        %p445 = pneg %p138
        %p446 = pneg %p135
        %p447 = pneg %p159
        %p448 = pneg %p156
        %p449 = pneg %p180
        %p450 = pneg %p177
        %p451 = pneg %p201
        %p452 = pneg %p198
        %p453 = pneg %p222
        %p454 = pneg %p219
        %p455 = pneg %p243
        %p456 = pneg %p240
        %p457 = pneg %p264
        %p458 = pneg %p261
        %p459 = pneg %p285
        %p460 = pneg %p282
        %p461 = pneg %p311
        %p462 = pneg %p308
        %s463 = sand.u32 %s298, 1
        %s464 = scalar_lea.sflag [#allocation4], %s463
        %s465 = sand.u32 %s298, 1
        %s466 = smul.addr %s465, 8
        %s467 = scalar_lea.vmem [#allocation8], %s466
        %p468 = scmp.lt.s32.totalorder %s28, 1
        %s469 = scalar_select %p468, %s28, 1
        %s470 = smul.addr %s469, 8
        %s471 = scalar_lea.vmem %s0, %s470
        %p472 = scmp.lt.s32.totalorder %s28, 1
        %s473 = scalar_select %p472, %s28, 1
        %s474 = smul.addr %s473, 8
        %s475 = scalar_lea.vmem %s1, %s474
        %v477 = vld [vmem:[%s471] sm:$0xff]
        %v478 = vld [vmem:[%s475] sm:$0xff]
        %v479 = vmul.f32 %v477, %v477
        %480 = vadd.xlane.f32.xlu0 %v479
        %v481 = vpop.xlane.xlu0 %480
        %v482 = vrcp.pop 128.0
        %v483 = vmul.f32 128.0, %v482
        %v484 = vsub.f32 1.0, %v483
        %v485 = vmul.f32 %v482, %v484
        %v486 = vadd.f32 %v482, %v485
        %vm487 = vweird.f32 %v482
        %v488 = vsel %vm487, %v482, %v486
        %v489 = vmul.f32 %v481, %v488
        %v490 = vadd.f32 %v489, 1e-06
        %v491 = vrsqrt.pop %v490
        %v492 = vmul.f32 %v491, %v490
        %v493 = vmul.f32 %v492, %v491
        %v494 = vmul.f32 0.5, %v493
        %v495 = vsub.f32 1.5, %v494
        %v496 = vmul.f32 %v491, %v495
        %vm497 = vweird.f32 %v490
        %vm498 = vweird.f32 %v491
        %vm499 = vmor %vm497, %vm498
        %v500 = vsel %vm499, %v491, %v496
        %v501 = vmul.f32 %v477, %v500
        %v502 = vld [vmem:[%s6] sm:$0x1]
        %v504 = vperm.slane %v502, 0
        %v506 = vmul.f32 %v501, %v504
        %v507 = vpack.c.bf16 %v506, %v506
        %v508 = vld [vmem:[#allocation2] sm:$0xff]
        %v509 = vld [vmem:[#allocation2 + $0x8] sm:$0xff]
        %v510 = vld [vmem:[#allocation2 + $0x10] sm:$0xf]
        %v511 = vld [vmem:[#allocation2 + $0x14] sm:$0xff]
        %v512 = vld [vmem:[#allocation2 + $0x1c] sm:$0xff]
        %v513 = vld [vmem:[#allocation2 + $0x24] sm:$0xf]
        %v514 = vld [vmem:[#allocation2 + $0x28] sm:$0xff]
        %v515 = vld [vmem:[#allocation2 + $0x30] sm:$0xff]
        %v516 = vld [vmem:[#allocation2 + $0x38] sm:$0xf]
        %v517 = vld [vmem:[#allocation2 + $0x3c] sm:$0xff]
        %v518 = vld [vmem:[#allocation2 + $0x44] sm:$0xff]
        %v519 = vld [vmem:[#allocation2 + $0x4c] sm:$0xf]
        %v520 = vld [vmem:[#allocation2 + $0x50] sm:$0xff]
        %v521 = vld [vmem:[#allocation2 + $0x58] sm:$0xff]
        %v522 = vld [vmem:[#allocation2 + $0x60] sm:$0xf]
        %v523 = vld [vmem:[#allocation2 + $0x64] sm:$0xff]
        %v524 = vld [vmem:[#allocation2 + $0x6c] sm:$0xff]
        %v525 = vld [vmem:[#allocation2 + $0x74] sm:$0xf]
        %v526 = vld [vmem:[#allocation2 + $0x78] sm:$0xff]
        %v527 = vld [vmem:[#allocation2 + $0x80] sm:$0xff]
        %v528 = vld [vmem:[#allocation2 + $0x88] sm:$0xf]
        %v529 = vld [vmem:[#allocation2 + $0x8c] sm:$0xff]
        %v530 = vld [vmem:[#allocation2 + $0x94] sm:$0xff]
        %v531 = vld [vmem:[#allocation2 + $0x9c] sm:$0xf]
        %v532 = vld [vmem:[#allocation2 + $0xa0] sm:$0xff]
        %v533 = vld [vmem:[#allocation2 + $0xa8] sm:$0xff]
        %v534 = vld [vmem:[#allocation2 + $0xb0] sm:$0xf]
        %v535 = vld [vmem:[#allocation2 + $0xb4] sm:$0xff]
        %v536 = vld [vmem:[#allocation2 + $0xbc] sm:$0xff]
        %v537 = vld [vmem:[#allocation2 + $0xc4] sm:$0xf]
        %v538 = vld [vmem:[#allocation2 + $0xc8] sm:$0xff]
        %v539 = vld [vmem:[#allocation2 + $0xd0] sm:$0xff]
        %v540 = vld [vmem:[#allocation2 + $0xd8] sm:$0xf]
        %v541 = vld [vmem:[#allocation2 + $0xdc] sm:$0xff]
        %v542 = vld [vmem:[#allocation2 + $0xe4] sm:$0xff]
        %v543 = vld [vmem:[#allocation2 + $0xec] sm:$0xf]
        %v544 = vld [vmem:[#allocation2 + $0xf0] sm:$0xff]
        %v545 = vld [vmem:[#allocation2 + $0xf8] sm:$0xff]
        %v546 = vld [vmem:[#allocation2 + $0x100] sm:$0xf]
        %v547 = vld [vmem:[#allocation2 + $0x104] sm:$0xff]
        %v548 = vld [vmem:[#allocation2 + $0x10c] sm:$0xff]
        %v549 = vld [vmem:[#allocation2 + $0x114] sm:$0xf]
        %v550 = vld [vmem:[#allocation2 + $0x118] sm:$0xff]
        %v551 = vld [vmem:[#allocation2 + $0x120] sm:$0xff]
        %v552 = vld [vmem:[#allocation2 + $0x128] sm:$0xf]
        %v553 = vld [vmem:[#allocation2 + $0x12c] sm:$0xff]
        %v554 = vld [vmem:[#allocation2 + $0x134] sm:$0xff]
        %v555 = vld [vmem:[#allocation2 + $0x13c] sm:$0xf]
        %v604 = vunpack.c.l.b16 %v508
        %v605 = vunpack.c.h.b16 %v508
        %v606 = vunpack.c.l.b16 %v509
        %v607 = vunpack.c.h.b16 %v509
        %v608 = vunpack.c.l.b16 %v510
        %v609 = vunpack.c.l.b16 %v511
        %v610 = vunpack.c.h.b16 %v511
        %v611 = vunpack.c.l.b16 %v512
        %v612 = vunpack.c.h.b16 %v512
        %v613 = vunpack.c.l.b16 %v513
        %v614 = vunpack.c.l.b16 %v514
        %v615 = vunpack.c.h.b16 %v514
        %v616 = vunpack.c.l.b16 %v515
        %v617 = vunpack.c.h.b16 %v515
        %v618 = vunpack.c.l.b16 %v516
        %v619 = vunpack.c.l.b16 %v517
        %v620 = vunpack.c.h.b16 %v517
        %v621 = vunpack.c.l.b16 %v518
        %v622 = vunpack.c.h.b16 %v518
        %v623 = vunpack.c.l.b16 %v519
        %v624 = vunpack.c.l.b16 %v520
        %v625 = vunpack.c.h.b16 %v520
        %v626 = vunpack.c.l.b16 %v521
        %v627 = vunpack.c.h.b16 %v521
        %v628 = vunpack.c.l.b16 %v522
        %v629 = vunpack.c.l.b16 %v523
        %v630 = vunpack.c.h.b16 %v523
        %v631 = vunpack.c.l.b16 %v524
        %v632 = vunpack.c.h.b16 %v524
        %v633 = vunpack.c.l.b16 %v525
        %v634 = vunpack.c.l.b16 %v526
        %v635 = vunpack.c.h.b16 %v526
        %v636 = vunpack.c.l.b16 %v527
        %v637 = vunpack.c.h.b16 %v527
        %v638 = vunpack.c.l.b16 %v528
        %v639 = vunpack.c.l.b16 %v529
        %v640 = vunpack.c.h.b16 %v529
        %v641 = vunpack.c.l.b16 %v530
        %v642 = vunpack.c.h.b16 %v530
        %v643 = vunpack.c.l.b16 %v531
        %v644 = vunpack.c.l.b16 %v532
        %v645 = vunpack.c.h.b16 %v532
        %v646 = vunpack.c.l.b16 %v533
        %v647 = vunpack.c.h.b16 %v533
        %v648 = vunpack.c.l.b16 %v534
        %v649 = vunpack.c.l.b16 %v535
        %v650 = vunpack.c.h.b16 %v535
        %v651 = vunpack.c.l.b16 %v536
        %v652 = vunpack.c.h.b16 %v536
        %v653 = vunpack.c.l.b16 %v537
        %v654 = vunpack.c.l.b16 %v538
        %v655 = vunpack.c.h.b16 %v538
        %v656 = vunpack.c.l.b16 %v539
        %v657 = vunpack.c.h.b16 %v539
        %v658 = vunpack.c.l.b16 %v540
        %v659 = vunpack.c.l.b16 %v541
        %v660 = vunpack.c.h.b16 %v541
        %v661 = vunpack.c.l.b16 %v542
        %v662 = vunpack.c.h.b16 %v542
        %v663 = vunpack.c.l.b16 %v543
        %v664 = vunpack.c.l.b16 %v544
        %v665 = vunpack.c.h.b16 %v544
        %v666 = vunpack.c.l.b16 %v545
        %v667 = vunpack.c.h.b16 %v545
        %v668 = vunpack.c.l.b16 %v546
        %v669 = vunpack.c.l.b16 %v547
        %v670 = vunpack.c.h.b16 %v547
        %v671 = vunpack.c.l.b16 %v548
        %v672 = vunpack.c.h.b16 %v548
        %v673 = vunpack.c.l.b16 %v549
        %v674 = vunpack.c.l.b16 %v550
        %v675 = vunpack.c.h.b16 %v550
        %v676 = vunpack.c.l.b16 %v551
        %v677 = vunpack.c.h.b16 %v551
        %v678 = vunpack.c.l.b16 %v552
        %v679 = vunpack.c.l.b16 %v553
        %v680 = vunpack.c.h.b16 %v553
        %v681 = vunpack.c.l.b16 %v554
        %v682 = vunpack.c.h.b16 %v554
        %v683 = vunpack.c.l.b16 %v555
        %v684 = vpack.c.b16 %v609, %v604
        %v685 = vpack.c.b16 %v610, %v605
        %v686 = vpack.c.b16 %v611, %v606
        %v687 = vpack.c.b16 %v612, %v607
        %v688 = vpack.c.b16 %v613, %v608
        %v689 = vpack.c.b16 %v619, %v614
        %v690 = vpack.c.b16 %v620, %v615
        %v691 = vpack.c.b16 %v621, %v616
        %v692 = vpack.c.b16 %v622, %v617
        %v693 = vpack.c.b16 %v623, %v618
        %v694 = vpack.c.b16 %v629, %v624
        %v695 = vpack.c.b16 %v630, %v625
        %v696 = vpack.c.b16 %v631, %v626
        %v697 = vpack.c.b16 %v632, %v627
        %v698 = vpack.c.b16 %v633, %v628
        %v699 = vpack.c.b16 %v639, %v634
        %v700 = vpack.c.b16 %v640, %v635
        %v701 = vpack.c.b16 %v641, %v636
        %v702 = vpack.c.b16 %v642, %v637
        %v703 = vpack.c.b16 %v643, %v638
        %v704 = vpack.c.b16 %v649, %v644
        %v705 = vpack.c.b16 %v650, %v645
        %v706 = vpack.c.b16 %v651, %v646
        %v707 = vpack.c.b16 %v652, %v647
        %v708 = vpack.c.b16 %v653, %v648
        %v709 = vpack.c.b16 %v659, %v654
        %v710 = vpack.c.b16 %v660, %v655
        %v711 = vpack.c.b16 %v661, %v656
        %v712 = vpack.c.b16 %v662, %v657
        %v713 = vpack.c.b16 %v663, %v658
        %v714 = vpack.c.b16 %v669, %v664
        %v715 = vpack.c.b16 %v670, %v665
        %v716 = vpack.c.b16 %v671, %v666
        %v717 = vpack.c.b16 %v672, %v667
        %v718 = vpack.c.b16 %v673, %v668
        %v719 = vpack.c.b16 %v679, %v674
        %v720 = vpack.c.b16 %v680, %v675
        %v721 = vpack.c.b16 %v681, %v676
        %v722 = vpack.c.b16 %v682, %v677
        %v723 = vpack.c.b16 %v683, %v678
        %764 = vmatpush.bf16.msra.mxu0 %v719
        %765 = vmatpush.bf16.msra.mxu0 %v714
        %766 = vmatpush.bf16.msra.mxu0 %v709
        %767 = vmatpush.bf16.msra.mxu0 %v704
        %768 = vmatpush.bf16.msra.mxu0 %v699
        %769 = vmatpush.bf16.msra.mxu0 %v694
        %770 = vmatpush.bf16.msra.mxu0 %v689
        %771 = vmatpush.bf16.msra.mxu0 %v684
        %772 = vmatmul.bf16.gmra.mxu0 %v507
        %v773 = vpop.f32.mrf.mxu0
        %v774 = vadd.f32 0.0, %v773
        %v775 = vpop.f32.mrf.mxu0
        %776 = vdwg.mxu0
        %777 = vmatpush.bf16.msra.mxu0 %v720
        %778 = vmatpush.bf16.msra.mxu0 %v715
        %779 = vmatpush.bf16.msra.mxu0 %v710
        %780 = vmatpush.bf16.msra.mxu0 %v705
        %781 = vmatpush.bf16.msra.mxu0 %v700
        %782 = vmatpush.bf16.msra.mxu0 %v695
        %783 = vmatpush.bf16.msra.mxu0 %v690
        %784 = vmatpush.bf16.msra.mxu0 %v685
        %785 = vmatmul.bf16.gmra.mxu0 %v507
        %v786 = vpop.f32.mrf.mxu0
        %v787 = vadd.f32 0.0, %v786
        %v788 = vpop.f32.mrf.mxu0
        %789 = vdwg.mxu0
        %790 = vmatpush.bf16.msra.mxu0 %v721
        %791 = vmatpush.bf16.msra.mxu0 %v716
        %792 = vmatpush.bf16.msra.mxu0 %v711
        %793 = vmatpush.bf16.msra.mxu0 %v706
        %794 = vmatpush.bf16.msra.mxu0 %v701
        %795 = vmatpush.bf16.msra.mxu0 %v696
        %796 = vmatpush.bf16.msra.mxu0 %v691
        %797 = vmatpush.bf16.msra.mxu0 %v686
        %798 = vmatmul.bf16.gmra.mxu0 %v507
        %v799 = vpop.f32.mrf.mxu0
        %v800 = vadd.f32 0.0, %v799
        %v801 = vpop.f32.mrf.mxu0
        %802 = vdwg.mxu0
        %803 = vmatpush.bf16.msra.mxu0 %v722
        %804 = vmatpush.bf16.msra.mxu0 %v717
        %805 = vmatpush.bf16.msra.mxu0 %v712
        %806 = vmatpush.bf16.msra.mxu0 %v707
        %807 = vmatpush.bf16.msra.mxu0 %v702
        %808 = vmatpush.bf16.msra.mxu0 %v697
        %809 = vmatpush.bf16.msra.mxu0 %v692
        %810 = vmatpush.bf16.msra.mxu0 %v687
        %811 = vmatmul.bf16.gmra.mxu0 %v507
        %v812 = vpop.f32.mrf.mxu0
        %v813 = vadd.f32 0.0, %v812
        %v814 = vpop.f32.mrf.mxu0
        %815 = vdwg.mxu0
        %816 = vmatpush.bf16.msra.mxu0 %v723
        %817 = vmatpush.bf16.msra.mxu0 %v718
        %818 = vmatpush.bf16.msra.mxu0 %v713
        %819 = vmatpush.bf16.msra.mxu0 %v708
        %820 = vmatpush.bf16.msra.mxu0 %v703
        %821 = vmatpush.bf16.msra.mxu0 %v698
        %822 = vmatpush.bf16.msra.mxu0 %v693
        %823 = vmatpush.bf16.msra.mxu0 %v688
        %824 = vmatmul.bf16.gmra.mxu0 %v507
        %v825 = vpop.f32.mrf.mxu0
        %v826 = vadd.f32 0.0, %v825
        %v827 = vpop.f32.mrf.mxu0
        %828 = vdwg.mxu0
        %v829 = vld [vmem:[%s2] sm:$0xff]
        %v830 = vmul.f32 %v774, %v829
        %v831 = vld [vmem:[%s3] sm:$0xff]
        %v832 = vmul.f32 %v787, %v831
        %v833 = vadd.f32 %v830, %v832
        %v834 = vld [vmem:[%s4] sm:$0xff]
        %v835 = vmul.f32 %v800, %v834
        %v836 = vld [vmem:[%s5] sm:$0xff]
        %v837 = vmul.f32 %v813, %v836
        %v838 = vadd.f32 %v835, %v837
        %vm839 = vcmask 261120
        %v841 = vsel %vm839, %v833, 0
        %v844 = vsel %vm839, %v838, 0
        %846 = vmatpush.xpose.msra.mxu0 0.0
        %847 = vmatpush.xpose.msra.mxu0 0.0
        %848 = vmatpush.xpose.msra.mxu0 0.0
        %849 = vmatpush.xpose.msra.mxu0 0.0
        %850 = vmatpush.xpose.msra.mxu0 0.0
        %851 = vmatpush.xpose.msra.mxu0 0.0
        %852 = vmatpush.xpose.msra.mxu0 0.0
        %853 = vmatpush.xpose.msra.mxu0 0.0
        %854 = vmatpush.xpose.msra.mxu0 0.0
        %855 = vmatpush.xpose.msra.mxu0 0.0
        %856 = vmatpush.xpose.msra.mxu0 0.0
        %857 = vmatpush.xpose.msra.mxu0 0.0
        %858 = vmatpush.xpose.msra.mxu0 0.0
        %859 = vmatpush.xpose.msra.mxu0 0.0
        %860 = vmatpush.xpose.msra.mxu0 0.0
        %861 = vmatpush.xpose.msra.mxu0 %v844
        %862 = vmatmul.f32.gmra.mxu0 %v841
        %v863 = vpop.f32.mrf.mxu0
        %v864 = vadd.f32 %v478, %v863
        %865 = vdwg.mxu0
        %vm866 = vcmask 64512
        %v867 = vsel %vm866, %v864, -inf
        %868 = vmax.xlane.f32.xlu0 %v867
        %v869 = vpop.xlane.xlu0 %868
        %v870 = vsub.f32 %v864, %v869
        %v871 = vmul.f32 %v870, 1.442695
        %v872 = vpow.pop %v871
        %v873 = vsel %vm866, %v872, 0.0
        %874 = vadd.xlane.f32.xlu0 %v873
        %v875 = vpop.xlane.xlu0 %874
        %v876 = vrcp.pop %v875
        %v877 = vmul.f32 %v872, %v876
        %v879 = vsel %vm866, %v877, 0
        %881 = vmatpush.msra.mxu0 0.0
        %882 = vmatpush.msra.mxu0 0.0
        %883 = vmatpush.msra.mxu0 0.0
        %884 = vmatpush.msra.mxu0 0.0
        %885 = vmatpush.msra.mxu0 0.0
        %886 = vmatpush.msra.mxu0 0.0
        %887 = vmatpush.msra.mxu0 0.0
        %888 = vmatpush.msra.mxu0 0.0
        %889 = vmatpush.msra.mxu0 0.0
        %890 = vmatpush.msra.mxu0 0.0
        %891 = vmatpush.msra.mxu0 0.0
        %892 = vmatpush.msra.mxu0 0.0
        %893 = vmatpush.msra.mxu0 0.0
        %894 = vmatpush.msra.mxu0 0.0
        %895 = vmatpush.msra.mxu0 0.0
        %896 = vmatpush.msra.mxu0 %v826
        %897 = vmatmul.f32.gmra.mxu0 %v879
        %v898 = vpop.f32.mrf.mxu0
        %v899 = vadd.f32 0.0, %v898
        %900 = vdwg.mxu0
        %v901 = vpack.c.bf16 %v899, %v899
        %v902 = vld [vmem:[%s9] sm:$0xf]
        %v903 = vld [vmem:[%s9 + $0x4] sm:$0xf]
        %v904 = vld [vmem:[%s9 + $0x8] sm:$0xf]
        %v905 = vld [vmem:[%s9 + $0xc] sm:$0xf]
        %v910 = vunpack.c.l.b16 %v902
        %v911 = vunpack.c.l.b16 %v903
        %v912 = vunpack.c.l.b16 %v904
        %v913 = vunpack.c.l.b16 %v905
        %v914 = vpack.c.b16 %v911, %v910
        %v915 = vpack.c.b16 %v913, %v912
        %v919 = vsel %vm839, %v901, 0
        %921 = vmatpush.bf16.msra.mxu0 0
        %922 = vmatpush.bf16.msra.mxu0 0
        %923 = vmatpush.bf16.msra.mxu0 0
        %924 = vmatpush.bf16.msra.mxu0 0
        %925 = vmatpush.bf16.msra.mxu0 0
        %926 = vmatpush.bf16.msra.mxu0 0
        %927 = vmatpush.bf16.msra.mxu0 %v915
        %928 = vmatpush.bf16.msra.mxu0 %v914
        %929 = vmatmul.bf16.gmra.mxu0 %v919
        %v930 = vpop.f32.mrf.mxu0
        %v931 = vadd.f32 0.0, %v930
        %v932 = vpop.f32.mrf.mxu0
        %933 = vdwg.mxu0
        %v934 = vadd.f32 %v477, %v931
        %935 = vrot.lane.b32.xlu0 %v833, 96
        %v936 = vpop.permute.xlu0 %935
        %937 = vrot.lane.b32.xlu0 %v838, 96
        %v938 = vpop.permute.xlu0 %937
        %v939 = vsel %vm839, %v936, 0
        %v941 = vsel %vm839, %v938, 0
        %943 = vmatpush.xpose.msra.mxu0 0.0
        %944 = vmatpush.xpose.msra.mxu0 0.0
        %945 = vmatpush.xpose.msra.mxu0 0.0
        %946 = vmatpush.xpose.msra.mxu0 0.0
        %947 = vmatpush.xpose.msra.mxu0 0.0
        %948 = vmatpush.xpose.msra.mxu0 0.0
        %949 = vmatpush.xpose.msra.mxu0 0.0
        %950 = vmatpush.xpose.msra.mxu0 0.0
        %951 = vmatpush.xpose.msra.mxu0 0.0
        %952 = vmatpush.xpose.msra.mxu0 0.0
        %953 = vmatpush.xpose.msra.mxu0 0.0
        %954 = vmatpush.xpose.msra.mxu0 0.0
        %955 = vmatpush.xpose.msra.mxu0 0.0
        %956 = vmatpush.xpose.msra.mxu0 0.0
        %957 = vmatpush.xpose.msra.mxu0 0.0
        %958 = vmatpush.xpose.msra.mxu0 %v941
        %959 = vmatmul.f32.gmra.mxu0 %v939
        %v960 = vpop.f32.mrf.mxu0
        %v961 = vadd.f32 %v478, %v960
        %962 = vdwg.mxu0
        %v963 = vsel %vm866, %v961, -inf
        %964 = vmax.xlane.f32.xlu0 %v963
        %v965 = vpop.xlane.xlu0 %964
        %v966 = vsub.f32 %v961, %v965
        %v967 = vmul.f32 %v966, 1.442695
        %v968 = vpow.pop %v967
        %v969 = vsel %vm866, %v968, 0.0
        %970 = vadd.xlane.f32.xlu0 %v969
        %v971 = vpop.xlane.xlu0 %970
        %v972 = vrcp.pop %v971
        %v973 = vmul.f32 %v968, %v972
        %975 = vrot.lane.b32.xlu0 %v826, 96
        %v976 = vpop.permute.xlu0 %975
        %v979 = vsel %vm866, %v973, 0
        %981 = vmatpush.msra.mxu0 0.0
        %982 = vmatpush.msra.mxu0 0.0
        %983 = vmatpush.msra.mxu0 0.0
        %984 = vmatpush.msra.mxu0 0.0
        %985 = vmatpush.msra.mxu0 0.0
        %986 = vmatpush.msra.mxu0 0.0
        %987 = vmatpush.msra.mxu0 0.0
        %988 = vmatpush.msra.mxu0 0.0
        %989 = vmatpush.msra.mxu0 0.0
        %990 = vmatpush.msra.mxu0 0.0
        %991 = vmatpush.msra.mxu0 0.0
        %992 = vmatpush.msra.mxu0 0.0
        %993 = vmatpush.msra.mxu0 0.0
        %994 = vmatpush.msra.mxu0 0.0
        %995 = vmatpush.msra.mxu0 0.0
        %996 = vmatpush.msra.mxu0 %v976
        %997 = vmatmul.f32.gmra.mxu0 %v979
        %v998 = vpop.f32.mrf.mxu0
        %v999 = vadd.f32 0.0, %v998
        %1000 = vdwg.mxu0
        %v1001 = vpack.c.bf16 %v999, %v999
        %v1002 = vld [vmem:[%s9 + $0x10] sm:$0xf]
        %v1003 = vld [vmem:[%s9 + $0x14] sm:$0xf]
        %v1004 = vld [vmem:[%s9 + $0x18] sm:$0xf]
        %v1005 = vld [vmem:[%s9 + $0x1c] sm:$0xf]
        %v1010 = vunpack.c.l.b16 %v1002
        %v1011 = vunpack.c.l.b16 %v1003
        %v1012 = vunpack.c.l.b16 %v1004
        %v1013 = vunpack.c.l.b16 %v1005
        %v1014 = vpack.c.b16 %v1011, %v1010
        %v1015 = vpack.c.b16 %v1013, %v1012
        %v1019 = vsel %vm839, %v1001, 0
        %1021 = vmatpush.bf16.msra.mxu0 0
        %1022 = vmatpush.bf16.msra.mxu0 0
        %1023 = vmatpush.bf16.msra.mxu0 0
        %1024 = vmatpush.bf16.msra.mxu0 0
        %1025 = vmatpush.bf16.msra.mxu0 0
        %1026 = vmatpush.bf16.msra.mxu0 0
        %1027 = vmatpush.bf16.msra.mxu0 %v1015
        %1028 = vmatpush.bf16.msra.mxu0 %v1014
        %1029 = vmatmul.bf16.gmra.mxu0 %v1019
        %v1030 = vpop.f32.mrf.mxu0
        %v1031 = vadd.f32 0.0, %v1030
        %v1032 = vpop.f32.mrf.mxu0
        %1033 = vdwg.mxu0
        %v1034 = vadd.f32 %v934, %v1031
        %1035 = vrot.lane.b32.xlu0 %v833, 64
        %v1036 = vpop.permute.xlu0 %1035
        %1037 = vrot.lane.b32.xlu0 %v838, 64
        %v1038 = vpop.permute.xlu0 %1037
        %v1039 = vsel %vm839, %v1036, 0
        %v1041 = vsel %vm839, %v1038, 0
        %1043 = vmatpush.xpose.msra.mxu0 0.0
        %1044 = vmatpush.xpose.msra.mxu0 0.0
        %1045 = vmatpush.xpose.msra.mxu0 0.0
        %1046 = vmatpush.xpose.msra.mxu0 0.0
        %1047 = vmatpush.xpose.msra.mxu0 0.0
        %1048 = vmatpush.xpose.msra.mxu0 0.0
        %1049 = vmatpush.xpose.msra.mxu0 0.0
        %1050 = vmatpush.xpose.msra.mxu0 0.0
        %1051 = vmatpush.xpose.msra.mxu0 0.0
        %1052 = vmatpush.xpose.msra.mxu0 0.0
        %1053 = vmatpush.xpose.msra.mxu0 0.0
        %1054 = vmatpush.xpose.msra.mxu0 0.0
        %1055 = vmatpush.xpose.msra.mxu0 0.0
        %1056 = vmatpush.xpose.msra.mxu0 0.0
        %1057 = vmatpush.xpose.msra.mxu0 0.0
        %1058 = vmatpush.xpose.msra.mxu0 %v1041
        %1059 = vmatmul.f32.gmra.mxu0 %v1039
        %v1060 = vpop.f32.mrf.mxu0
        %v1061 = vadd.f32 %v478, %v1060
        %1062 = vdwg.mxu0
        %v1063 = vsel %vm866, %v1061, -inf
        %1064 = vmax.xlane.f32.xlu0 %v1063
        %v1065 = vpop.xlane.xlu0 %1064
        %v1066 = vsub.f32 %v1061, %v1065
        %v1067 = vmul.f32 %v1066, 1.442695
        %v1068 = vpow.pop %v1067
        %v1069 = vsel %vm866, %v1068, 0.0
        %1070 = vadd.xlane.f32.xlu0 %v1069
        %v1071 = vpop.xlane.xlu0 %1070
        %v1072 = vrcp.pop %v1071
        %v1073 = vmul.f32 %v1068, %v1072
        %1074 = vrot.lane.b32.xlu0 %v826, 64
        %v1075 = vpop.permute.xlu0 %1074
        %v1078 = vsel %vm866, %v1073, 0
        %1080 = vmatpush.msra.mxu0 0.0
        %1081 = vmatpush.msra.mxu0 0.0
        %1082 = vmatpush.msra.mxu0 0.0
        %1083 = vmatpush.msra.mxu0 0.0
        %1084 = vmatpush.msra.mxu0 0.0
        %1085 = vmatpush.msra.mxu0 0.0
        %1086 = vmatpush.msra.mxu0 0.0
        %1087 = vmatpush.msra.mxu0 0.0
        %1088 = vmatpush.msra.mxu0 0.0
        %1089 = vmatpush.msra.mxu0 0.0
        %1090 = vmatpush.msra.mxu0 0.0
        %1091 = vmatpush.msra.mxu0 0.0
        %1092 = vmatpush.msra.mxu0 0.0
        %1093 = vmatpush.msra.mxu0 0.0
        %1094 = vmatpush.msra.mxu0 0.0
        %1095 = vmatpush.msra.mxu0 %v1075
        %1096 = vmatmul.f32.gmra.mxu0 %v1078
        %v1097 = vpop.f32.mrf.mxu0
        %v1098 = vadd.f32 0.0, %v1097
        %1099 = vdwg.mxu0
        %v1100 = vpack.c.bf16 %v1098, %v1098
        %v1101 = vld [vmem:[%s9 + $0x20] sm:$0xf]
        %v1102 = vld [vmem:[%s9 + $0x24] sm:$0xf]
        %v1103 = vld [vmem:[%s9 + $0x28] sm:$0xf]
        %v1104 = vld [vmem:[%s9 + $0x2c] sm:$0xf]
        %v1109 = vunpack.c.l.b16 %v1101
        %v1110 = vunpack.c.l.b16 %v1102
        %v1111 = vunpack.c.l.b16 %v1103
        %v1112 = vunpack.c.l.b16 %v1104
        %v1113 = vpack.c.b16 %v1110, %v1109
        %v1114 = vpack.c.b16 %v1112, %v1111
        %v1118 = vsel %vm839, %v1100, 0
        %1120 = vmatpush.bf16.msra.mxu0 0
        %1121 = vmatpush.bf16.msra.mxu0 0
        %1122 = vmatpush.bf16.msra.mxu0 0
        %1123 = vmatpush.bf16.msra.mxu0 0
        %1124 = vmatpush.bf16.msra.mxu0 0
        %1125 = vmatpush.bf16.msra.mxu0 0
        %1126 = vmatpush.bf16.msra.mxu0 %v1114
        %1127 = vmatpush.bf16.msra.mxu0 %v1113
        %1128 = vmatmul.bf16.gmra.mxu0 %v1118
        %v1129 = vpop.f32.mrf.mxu0
        %v1130 = vadd.f32 0.0, %v1129
        %v1131 = vpop.f32.mrf.mxu0
        %1132 = vdwg.mxu0
        %v1133 = vadd.f32 %v1034, %v1130
        %1134 = vrot.lane.b32.xlu0 %v833, 32
        %v1135 = vpop.permute.xlu0 %1134
        %1136 = vrot.lane.b32.xlu0 %v838, 32
        %v1137 = vpop.permute.xlu0 %1136
        %v1138 = vsel %vm839, %v1135, 0
        %v1140 = vsel %vm839, %v1137, 0
        %1142 = vmatpush.xpose.msra.mxu0 0.0
        %1143 = vmatpush.xpose.msra.mxu0 0.0
        %1144 = vmatpush.xpose.msra.mxu0 0.0
        %1145 = vmatpush.xpose.msra.mxu0 0.0
        %1146 = vmatpush.xpose.msra.mxu0 0.0
        %1147 = vmatpush.xpose.msra.mxu0 0.0
        %1148 = vmatpush.xpose.msra.mxu0 0.0
        %1149 = vmatpush.xpose.msra.mxu0 0.0
        %1150 = vmatpush.xpose.msra.mxu0 0.0
        %1151 = vmatpush.xpose.msra.mxu0 0.0
        %1152 = vmatpush.xpose.msra.mxu0 0.0
        %1153 = vmatpush.xpose.msra.mxu0 0.0
        %1154 = vmatpush.xpose.msra.mxu0 0.0
        %1155 = vmatpush.xpose.msra.mxu0 0.0
        %1156 = vmatpush.xpose.msra.mxu0 0.0
        %1157 = vmatpush.xpose.msra.mxu0 %v1140
        %1158 = vmatmul.f32.gmra.mxu0 %v1138
        %v1159 = vpop.f32.mrf.mxu0
        %v1160 = vadd.f32 %v478, %v1159
        %1161 = vdwg.mxu0
        %v1162 = vsel %vm866, %v1160, -inf
        %1163 = vmax.xlane.f32.xlu0 %v1162
        %v1164 = vpop.xlane.xlu0 %1163
        %v1165 = vsub.f32 %v1160, %v1164
        %v1166 = vmul.f32 %v1165, 1.442695
        %v1167 = vpow.pop %v1166
        %v1168 = vsel %vm866, %v1167, 0.0
        %1169 = vadd.xlane.f32.xlu0 %v1168
        %v1170 = vpop.xlane.xlu0 %1169
        %v1171 = vrcp.pop %v1170
        %v1172 = vmul.f32 %v1167, %v1171
        %1173 = vrot.lane.b32.xlu0 %v826, 32
        %v1174 = vpop.permute.xlu0 %1173
        %v1177 = vsel %vm866, %v1172, 0
        %1179 = vmatpush.msra.mxu0 0.0
        %1180 = vmatpush.msra.mxu0 0.0
        %1181 = vmatpush.msra.mxu0 0.0
        %1182 = vmatpush.msra.mxu0 0.0
        %1183 = vmatpush.msra.mxu0 0.0
        %1184 = vmatpush.msra.mxu0 0.0
        %1185 = vmatpush.msra.mxu0 0.0
        %1186 = vmatpush.msra.mxu0 0.0
        %1187 = vmatpush.msra.mxu0 0.0
        %1188 = vmatpush.msra.mxu0 0.0
        %1189 = vmatpush.msra.mxu0 0.0
        %1190 = vmatpush.msra.mxu0 0.0
        %1191 = vmatpush.msra.mxu0 0.0
        %1192 = vmatpush.msra.mxu0 0.0
        %1193 = vmatpush.msra.mxu0 0.0
        %1194 = vmatpush.msra.mxu0 %v1174
        %1195 = vmatmul.f32.gmra.mxu0 %v1177
        %v1196 = vpop.f32.mrf.mxu0
        %v1197 = vadd.f32 0.0, %v1196
        %1198 = vdwg.mxu0
        %v1199 = vpack.c.bf16 %v1197, %v1197
        %v1200 = vld [vmem:[%s9 + $0x30] sm:$0xf]
        %v1201 = vld [vmem:[%s9 + $0x34] sm:$0xf]
        %v1202 = vld [vmem:[%s9 + $0x38] sm:$0xf]
        %v1203 = vld [vmem:[%s9 + $0x3c] sm:$0xf]
        %v1208 = vunpack.c.l.b16 %v1200
        %v1209 = vunpack.c.l.b16 %v1201
        %v1210 = vunpack.c.l.b16 %v1202
        %v1211 = vunpack.c.l.b16 %v1203
        %v1212 = vpack.c.b16 %v1209, %v1208
        %v1213 = vpack.c.b16 %v1211, %v1210
        %v1217 = vsel %vm839, %v1199, 0
        %1219 = vmatpush.bf16.msra.mxu0 0
        %1220 = vmatpush.bf16.msra.mxu0 0
        %1221 = vmatpush.bf16.msra.mxu0 0
        %1222 = vmatpush.bf16.msra.mxu0 0
        %1223 = vmatpush.bf16.msra.mxu0 0
        %1224 = vmatpush.bf16.msra.mxu0 0
        %1225 = vmatpush.bf16.msra.mxu0 %v1213
        %1226 = vmatpush.bf16.msra.mxu0 %v1212
        %1227 = vmatmul.bf16.gmra.mxu0 %v1217
        %v1228 = vpop.f32.mrf.mxu0
        %v1229 = vadd.f32 0.0, %v1228
        %v1230 = vpop.f32.mrf.mxu0
        %1231 = vdwg.mxu0
        %v1232 = vadd.f32 %v1133, %v1229
        %v1233 = vmul.f32 %v1232, %v1232
        %1234 = vadd.xlane.f32.xlu0 %v1233
        %v1235 = vpop.xlane.xlu0 %1234
        %v1236 = vmul.f32 %v1235, %v488
        %v1237 = vadd.f32 %v1236, 1e-06
        %v1238 = vrsqrt.pop %v1237
        %v1239 = vmul.f32 %v1238, %v1237
        %v1240 = vmul.f32 %v1239, %v1238
        %v1241 = vmul.f32 0.5, %v1240
        %v1242 = vsub.f32 1.5, %v1241
        %v1243 = vmul.f32 %v1238, %v1242
        %vm1244 = vweird.f32 %v1237
        %vm1245 = vweird.f32 %v1238
        %vm1246 = vmor %vm1244, %vm1245
        %v1247 = vsel %vm1246, %v1238, %v1243
        %v1248 = vmul.f32 %v1232, %v1247
        %v1249 = vld [vmem:[%s7] sm:$0x1]
        %v1251 = vperm.slane %v1249, 0
        %v1253 = vmul.f32 %v1248, %v1251
        %v1254 = vpack.c.bf16 %v1253, %v1253
        %v1255 = vld [vmem:[#allocation5] sm:$0xff]
        %v1256 = vld [vmem:[#allocation5 + $0x8] sm:$0xff]
        %v1257 = vld [vmem:[#allocation5 + $0x10] sm:$0xff]
        %v1258 = vld [vmem:[#allocation5 + $0x18] sm:$0xff]
        %v1259 = vld [vmem:[#allocation5 + $0x20] sm:$0xff]
        %v1260 = vld [vmem:[#allocation5 + $0x28] sm:$0xff]
        %v1261 = vld [vmem:[#allocation5 + $0x30] sm:$0xff]
        %v1262 = vld [vmem:[#allocation5 + $0x38] sm:$0xff]
        %v1263 = vld [vmem:[#allocation5 + $0x40] sm:$0xff]
        %v1264 = vld [vmem:[#allocation5 + $0x48] sm:$0xff]
        %v1265 = vld [vmem:[#allocation5 + $0x50] sm:$0xff]
        %v1266 = vld [vmem:[#allocation5 + $0x58] sm:$0xff]
        %v1267 = vld [vmem:[#allocation5 + $0x60] sm:$0xff]
        %v1268 = vld [vmem:[#allocation5 + $0x68] sm:$0xff]
        %v1269 = vld [vmem:[#allocation5 + $0x70] sm:$0xff]
        %v1270 = vld [vmem:[#allocation5 + $0x78] sm:$0xff]
        %v1271 = vld [vmem:[#allocation5 + $0x80] sm:$0xff]
        %v1272 = vld [vmem:[#allocation5 + $0x88] sm:$0xff]
        %v1273 = vld [vmem:[#allocation5 + $0x90] sm:$0xff]
        %v1274 = vld [vmem:[#allocation5 + $0x98] sm:$0xff]
        %v1275 = vld [vmem:[#allocation5 + $0xa0] sm:$0xff]
        %v1276 = vld [vmem:[#allocation5 + $0xa8] sm:$0xff]
        %v1277 = vld [vmem:[#allocation5 + $0xb0] sm:$0xff]
        %v1278 = vld [vmem:[#allocation5 + $0xb8] sm:$0xff]
        %v1279 = vld [vmem:[#allocation5 + $0xc0] sm:$0xff]
        %v1280 = vld [vmem:[#allocation5 + $0xc8] sm:$0xff]
        %v1281 = vld [vmem:[#allocation5 + $0xd0] sm:$0xff]
        %v1282 = vld [vmem:[#allocation5 + $0xd8] sm:$0xff]
        %v1283 = vld [vmem:[#allocation5 + $0xe0] sm:$0xff]
        %v1284 = vld [vmem:[#allocation5 + $0xe8] sm:$0xff]
        %v1285 = vld [vmem:[#allocation5 + $0xf0] sm:$0xff]
        %v1286 = vld [vmem:[#allocation5 + $0xf8] sm:$0xff]
        %v1287 = vld [vmem:[#allocation5 + $0x100] sm:$0xff]
        %v1288 = vld [vmem:[#allocation5 + $0x108] sm:$0xff]
        %v1289 = vld [vmem:[#allocation5 + $0x110] sm:$0xff]
        %v1290 = vld [vmem:[#allocation5 + $0x118] sm:$0xff]
        %v1291 = vld [vmem:[#allocation5 + $0x120] sm:$0xff]
        %v1292 = vld [vmem:[#allocation5 + $0x128] sm:$0xff]
        %v1293 = vld [vmem:[#allocation5 + $0x130] sm:$0xff]
        %v1294 = vld [vmem:[#allocation5 + $0x138] sm:$0xff]
        %v1295 = vld [vmem:[#allocation5 + $0x140] sm:$0xff]
        %v1296 = vld [vmem:[#allocation5 + $0x148] sm:$0xff]
        %v1297 = vld [vmem:[#allocation5 + $0x150] sm:$0xff]
        %v1298 = vld [vmem:[#allocation5 + $0x158] sm:$0xff]
        %v1299 = vld [vmem:[#allocation5 + $0x160] sm:$0xff]
        %v1300 = vld [vmem:[#allocation5 + $0x168] sm:$0xff]
        %v1301 = vld [vmem:[#allocation5 + $0x170] sm:$0xff]
        %v1302 = vld [vmem:[#allocation5 + $0x178] sm:$0xff]
        %v1303 = vld [vmem:[#allocation5 + $0x180] sm:$0xff]
        %v1304 = vld [vmem:[#allocation5 + $0x188] sm:$0xff]
        %v1305 = vld [vmem:[#allocation5 + $0x190] sm:$0xff]
        %v1306 = vld [vmem:[#allocation5 + $0x198] sm:$0xff]
        %v1307 = vld [vmem:[#allocation5 + $0x1a0] sm:$0xff]
        %v1308 = vld [vmem:[#allocation5 + $0x1a8] sm:$0xff]
        %v1309 = vld [vmem:[#allocation5 + $0x1b0] sm:$0xff]
        %v1310 = vld [vmem:[#allocation5 + $0x1b8] sm:$0xff]
        %v1311 = vld [vmem:[#allocation5 + $0x1c0] sm:$0xff]
        %v1312 = vld [vmem:[#allocation5 + $0x1c8] sm:$0xff]
        %v1313 = vld [vmem:[#allocation5 + $0x1d0] sm:$0xff]
        %v1314 = vld [vmem:[#allocation5 + $0x1d8] sm:$0xff]
        %v1315 = vld [vmem:[#allocation5 + $0x1e0] sm:$0xff]
        %v1316 = vld [vmem:[#allocation5 + $0x1e8] sm:$0xff]
        %v1317 = vld [vmem:[#allocation5 + $0x1f0] sm:$0xff]
        %v1318 = vld [vmem:[#allocation5 + $0x1f8] sm:$0xff]
        %v1383 = vunpack.c.l.b16 %v1255
        %v1384 = vunpack.c.h.b16 %v1255
        %v1385 = vunpack.c.l.b16 %v1256
        %v1386 = vunpack.c.h.b16 %v1256
        %v1387 = vunpack.c.l.b16 %v1257
        %v1388 = vunpack.c.h.b16 %v1257
        %v1389 = vunpack.c.l.b16 %v1258
        %v1390 = vunpack.c.h.b16 %v1258
        %v1391 = vunpack.c.l.b16 %v1259
        %v1392 = vunpack.c.h.b16 %v1259
        %v1393 = vunpack.c.l.b16 %v1260
        %v1394 = vunpack.c.h.b16 %v1260
        %v1395 = vunpack.c.l.b16 %v1261
        %v1396 = vunpack.c.h.b16 %v1261
        %v1397 = vunpack.c.l.b16 %v1262
        %v1398 = vunpack.c.h.b16 %v1262
        %v1399 = vunpack.c.l.b16 %v1263
        %v1400 = vunpack.c.h.b16 %v1263
        %v1401 = vunpack.c.l.b16 %v1264
        %v1402 = vunpack.c.h.b16 %v1264
        %v1403 = vunpack.c.l.b16 %v1265
        %v1404 = vunpack.c.h.b16 %v1265
        %v1405 = vunpack.c.l.b16 %v1266
        %v1406 = vunpack.c.h.b16 %v1266
        %v1407 = vunpack.c.l.b16 %v1267
        %v1408 = vunpack.c.h.b16 %v1267
        %v1409 = vunpack.c.l.b16 %v1268
        %v1410 = vunpack.c.h.b16 %v1268
        %v1411 = vunpack.c.l.b16 %v1269
        %v1412 = vunpack.c.h.b16 %v1269
        %v1413 = vunpack.c.l.b16 %v1270
        %v1414 = vunpack.c.h.b16 %v1270
        %v1415 = vunpack.c.l.b16 %v1271
        %v1416 = vunpack.c.h.b16 %v1271
        %v1417 = vunpack.c.l.b16 %v1272
        %v1418 = vunpack.c.h.b16 %v1272
        %v1419 = vunpack.c.l.b16 %v1273
        %v1420 = vunpack.c.h.b16 %v1273
        %v1421 = vunpack.c.l.b16 %v1274
        %v1422 = vunpack.c.h.b16 %v1274
        %v1423 = vunpack.c.l.b16 %v1275
        %v1424 = vunpack.c.h.b16 %v1275
        %v1425 = vunpack.c.l.b16 %v1276
        %v1426 = vunpack.c.h.b16 %v1276
        %v1427 = vunpack.c.l.b16 %v1277
        %v1428 = vunpack.c.h.b16 %v1277
        %v1429 = vunpack.c.l.b16 %v1278
        %v1430 = vunpack.c.h.b16 %v1278
        %v1431 = vunpack.c.l.b16 %v1279
        %v1432 = vunpack.c.h.b16 %v1279
        %v1433 = vunpack.c.l.b16 %v1280
        %v1434 = vunpack.c.h.b16 %v1280
        %v1435 = vunpack.c.l.b16 %v1281
        %v1436 = vunpack.c.h.b16 %v1281
        %v1437 = vunpack.c.l.b16 %v1282
        %v1438 = vunpack.c.h.b16 %v1282
        %v1439 = vunpack.c.l.b16 %v1283
        %v1440 = vunpack.c.h.b16 %v1283
        %v1441 = vunpack.c.l.b16 %v1284
        %v1442 = vunpack.c.h.b16 %v1284
        %v1443 = vunpack.c.l.b16 %v1285
        %v1444 = vunpack.c.h.b16 %v1285
        %v1445 = vunpack.c.l.b16 %v1286
        %v1446 = vunpack.c.h.b16 %v1286
        %v1447 = vunpack.c.l.b16 %v1287
        %v1448 = vunpack.c.h.b16 %v1287
        %v1449 = vunpack.c.l.b16 %v1288
        %v1450 = vunpack.c.h.b16 %v1288
        %v1451 = vunpack.c.l.b16 %v1289
        %v1452 = vunpack.c.h.b16 %v1289
        %v1453 = vunpack.c.l.b16 %v1290
        %v1454 = vunpack.c.h.b16 %v1290
        %v1455 = vunpack.c.l.b16 %v1291
        %v1456 = vunpack.c.h.b16 %v1291
        %v1457 = vunpack.c.l.b16 %v1292
        %v1458 = vunpack.c.h.b16 %v1292
        %v1459 = vunpack.c.l.b16 %v1293
        %v1460 = vunpack.c.h.b16 %v1293
        %v1461 = vunpack.c.l.b16 %v1294
        %v1462 = vunpack.c.h.b16 %v1294
        %v1463 = vunpack.c.l.b16 %v1295
        %v1464 = vunpack.c.h.b16 %v1295
        %v1465 = vunpack.c.l.b16 %v1296
        %v1466 = vunpack.c.h.b16 %v1296
        %v1467 = vunpack.c.l.b16 %v1297
        %v1468 = vunpack.c.h.b16 %v1297
        %v1469 = vunpack.c.l.b16 %v1298
        %v1470 = vunpack.c.h.b16 %v1298
        %v1471 = vunpack.c.l.b16 %v1299
        %v1472 = vunpack.c.h.b16 %v1299
        %v1473 = vunpack.c.l.b16 %v1300
        %v1474 = vunpack.c.h.b16 %v1300
        %v1475 = vunpack.c.l.b16 %v1301
        %v1476 = vunpack.c.h.b16 %v1301
        %v1477 = vunpack.c.l.b16 %v1302
        %v1478 = vunpack.c.h.b16 %v1302
        %v1479 = vunpack.c.l.b16 %v1303
        %v1480 = vunpack.c.h.b16 %v1303
        %v1481 = vunpack.c.l.b16 %v1304
        %v1482 = vunpack.c.h.b16 %v1304
        %v1483 = vunpack.c.l.b16 %v1305
        %v1484 = vunpack.c.h.b16 %v1305
        %v1485 = vunpack.c.l.b16 %v1306
        %v1486 = vunpack.c.h.b16 %v1306
        %v1487 = vunpack.c.l.b16 %v1307
        %v1488 = vunpack.c.h.b16 %v1307
        %v1489 = vunpack.c.l.b16 %v1308
        %v1490 = vunpack.c.h.b16 %v1308
        %v1491 = vunpack.c.l.b16 %v1309
        %v1492 = vunpack.c.h.b16 %v1309
        %v1493 = vunpack.c.l.b16 %v1310
        %v1494 = vunpack.c.h.b16 %v1310
        %v1495 = vunpack.c.l.b16 %v1311
        %v1496 = vunpack.c.h.b16 %v1311
        %v1497 = vunpack.c.l.b16 %v1312
        %v1498 = vunpack.c.h.b16 %v1312
        %v1499 = vunpack.c.l.b16 %v1313
        %v1500 = vunpack.c.h.b16 %v1313
        %v1501 = vunpack.c.l.b16 %v1314
        %v1502 = vunpack.c.h.b16 %v1314
        %v1503 = vunpack.c.l.b16 %v1315
        %v1504 = vunpack.c.h.b16 %v1315
        %v1505 = vunpack.c.l.b16 %v1316
        %v1506 = vunpack.c.h.b16 %v1316
        %v1507 = vunpack.c.l.b16 %v1317
        %v1508 = vunpack.c.h.b16 %v1317
        %v1509 = vunpack.c.l.b16 %v1318
        %v1510 = vunpack.c.h.b16 %v1318
        %v1511 = vpack.c.b16 %v1391, %v1383
        %v1512 = vpack.c.b16 %v1392, %v1384
        %v1513 = vpack.c.b16 %v1393, %v1385
        %v1514 = vpack.c.b16 %v1394, %v1386
        %v1515 = vpack.c.b16 %v1395, %v1387
        %v1516 = vpack.c.b16 %v1396, %v1388
        %v1517 = vpack.c.b16 %v1397, %v1389
        %v1518 = vpack.c.b16 %v1398, %v1390
        %v1519 = vpack.c.b16 %v1407, %v1399
        %v1520 = vpack.c.b16 %v1408, %v1400
        %v1521 = vpack.c.b16 %v1409, %v1401
        %v1522 = vpack.c.b16 %v1410, %v1402
        %v1523 = vpack.c.b16 %v1411, %v1403
        %v1524 = vpack.c.b16 %v1412, %v1404
        %v1525 = vpack.c.b16 %v1413, %v1405
        %v1526 = vpack.c.b16 %v1414, %v1406
        %v1527 = vpack.c.b16 %v1423, %v1415
        %v1528 = vpack.c.b16 %v1424, %v1416
        %v1529 = vpack.c.b16 %v1425, %v1417
        %v1530 = vpack.c.b16 %v1426, %v1418
        %v1531 = vpack.c.b16 %v1427, %v1419
        %v1532 = vpack.c.b16 %v1428, %v1420
        %v1533 = vpack.c.b16 %v1429, %v1421
        %v1534 = vpack.c.b16 %v1430, %v1422
        %v1535 = vpack.c.b16 %v1439, %v1431
        %v1536 = vpack.c.b16 %v1440, %v1432
        %v1537 = vpack.c.b16 %v1441, %v1433
        %v1538 = vpack.c.b16 %v1442, %v1434
        %v1539 = vpack.c.b16 %v1443, %v1435
        %v1540 = vpack.c.b16 %v1444, %v1436
        %v1541 = vpack.c.b16 %v1445, %v1437
        %v1542 = vpack.c.b16 %v1446, %v1438
        %v1543 = vpack.c.b16 %v1455, %v1447
        %v1544 = vpack.c.b16 %v1456, %v1448
        %v1545 = vpack.c.b16 %v1457, %v1449
        %v1546 = vpack.c.b16 %v1458, %v1450
        %v1547 = vpack.c.b16 %v1459, %v1451
        %v1548 = vpack.c.b16 %v1460, %v1452
        %v1549 = vpack.c.b16 %v1461, %v1453
        %v1550 = vpack.c.b16 %v1462, %v1454
        %v1551 = vpack.c.b16 %v1471, %v1463
        %v1552 = vpack.c.b16 %v1472, %v1464
        %v1553 = vpack.c.b16 %v1473, %v1465
        %v1554 = vpack.c.b16 %v1474, %v1466
        %v1555 = vpack.c.b16 %v1475, %v1467
        %v1556 = vpack.c.b16 %v1476, %v1468
        %v1557 = vpack.c.b16 %v1477, %v1469
        %v1558 = vpack.c.b16 %v1478, %v1470
        %v1559 = vpack.c.b16 %v1487, %v1479
        %v1560 = vpack.c.b16 %v1488, %v1480
        %v1561 = vpack.c.b16 %v1489, %v1481
        %v1562 = vpack.c.b16 %v1490, %v1482
        %v1563 = vpack.c.b16 %v1491, %v1483
        %v1564 = vpack.c.b16 %v1492, %v1484
        %v1565 = vpack.c.b16 %v1493, %v1485
        %v1566 = vpack.c.b16 %v1494, %v1486
        %v1567 = vpack.c.b16 %v1503, %v1495
        %v1568 = vpack.c.b16 %v1504, %v1496
        %v1569 = vpack.c.b16 %v1505, %v1497
        %v1570 = vpack.c.b16 %v1506, %v1498
        %v1571 = vpack.c.b16 %v1507, %v1499
        %v1572 = vpack.c.b16 %v1508, %v1500
        %v1573 = vpack.c.b16 %v1509, %v1501
        %v1574 = vpack.c.b16 %v1510, %v1502
        %1639 = vmatpush.bf16.msra.mxu0 %v1567
        %1640 = vmatpush.bf16.msra.mxu0 %v1559
        %1641 = vmatpush.bf16.msra.mxu0 %v1551
        %1642 = vmatpush.bf16.msra.mxu0 %v1543
        %1643 = vmatpush.bf16.msra.mxu0 %v1535
        %1644 = vmatpush.bf16.msra.mxu0 %v1527
        %1645 = vmatpush.bf16.msra.mxu0 %v1519
        %1646 = vmatpush.bf16.msra.mxu0 %v1511
        %1647 = vmatmul.bf16.gmra.mxu0 %v1254
        %v1648 = vpop.f32.mrf.mxu0
        %v1649 = vadd.f32 0.0, %v1648
        %v1650 = vpop.f32.mrf.mxu0
        %1651 = vdwg.mxu0
        %1652 = vmatpush.bf16.msra.mxu0 %v1568
        %1653 = vmatpush.bf16.msra.mxu0 %v1560
        %1654 = vmatpush.bf16.msra.mxu0 %v1552
        %1655 = vmatpush.bf16.msra.mxu0 %v1544
        %1656 = vmatpush.bf16.msra.mxu0 %v1536
        %1657 = vmatpush.bf16.msra.mxu0 %v1528
        %1658 = vmatpush.bf16.msra.mxu0 %v1520
        %1659 = vmatpush.bf16.msra.mxu0 %v1512
        %1660 = vmatmul.bf16.gmra.mxu0 %v1254
        %v1661 = vpop.f32.mrf.mxu0
        %v1662 = vadd.f32 0.0, %v1661
        %v1663 = vpop.f32.mrf.mxu0
        %1664 = vdwg.mxu0
        %1665 = vmatpush.bf16.msra.mxu0 %v1569
        %1666 = vmatpush.bf16.msra.mxu0 %v1561
        %1667 = vmatpush.bf16.msra.mxu0 %v1553
        %1668 = vmatpush.bf16.msra.mxu0 %v1545
        %1669 = vmatpush.bf16.msra.mxu0 %v1537
        %1670 = vmatpush.bf16.msra.mxu0 %v1529
        %1671 = vmatpush.bf16.msra.mxu0 %v1521
        %1672 = vmatpush.bf16.msra.mxu0 %v1513
        %1673 = vmatmul.bf16.gmra.mxu0 %v1254
        %v1674 = vpop.f32.mrf.mxu0
        %v1675 = vadd.f32 0.0, %v1674
        %v1676 = vpop.f32.mrf.mxu0
        %1677 = vdwg.mxu0
        %1678 = vmatpush.bf16.msra.mxu0 %v1570
        %1679 = vmatpush.bf16.msra.mxu0 %v1562
        %1680 = vmatpush.bf16.msra.mxu0 %v1554
        %1681 = vmatpush.bf16.msra.mxu0 %v1546
        %1682 = vmatpush.bf16.msra.mxu0 %v1538
        %1683 = vmatpush.bf16.msra.mxu0 %v1530
        %1684 = vmatpush.bf16.msra.mxu0 %v1522
        %1685 = vmatpush.bf16.msra.mxu0 %v1514
        %1686 = vmatmul.bf16.gmra.mxu0 %v1254
        %v1687 = vpop.f32.mrf.mxu0
        %v1688 = vadd.f32 0.0, %v1687
        %v1689 = vpop.f32.mrf.mxu0
        %1690 = vdwg.mxu0
        %1691 = vmatpush.bf16.msra.mxu0 %v1571
        %1692 = vmatpush.bf16.msra.mxu0 %v1563
        %1693 = vmatpush.bf16.msra.mxu0 %v1555
        %1694 = vmatpush.bf16.msra.mxu0 %v1547
        %1695 = vmatpush.bf16.msra.mxu0 %v1539
        %1696 = vmatpush.bf16.msra.mxu0 %v1531
        %1697 = vmatpush.bf16.msra.mxu0 %v1523
        %1698 = vmatpush.bf16.msra.mxu0 %v1515
        %1699 = vmatmul.bf16.gmra.mxu0 %v1254
        %v1700 = vpop.f32.mrf.mxu0
        %v1701 = vadd.f32 0.0, %v1700
        %v1702 = vpop.f32.mrf.mxu0
        %1703 = vdwg.mxu0
        %1704 = vmatpush.bf16.msra.mxu0 %v1572
        %1705 = vmatpush.bf16.msra.mxu0 %v1564
        %1706 = vmatpush.bf16.msra.mxu0 %v1556
        %1707 = vmatpush.bf16.msra.mxu0 %v1548
        %1708 = vmatpush.bf16.msra.mxu0 %v1540
        %1709 = vmatpush.bf16.msra.mxu0 %v1532
        %1710 = vmatpush.bf16.msra.mxu0 %v1524
        %1711 = vmatpush.bf16.msra.mxu0 %v1516
        %1712 = vmatmul.bf16.gmra.mxu0 %v1254
        %v1713 = vpop.f32.mrf.mxu0
        %v1714 = vadd.f32 0.0, %v1713
        %v1715 = vpop.f32.mrf.mxu0
        %1716 = vdwg.mxu0
        %1717 = vmatpush.bf16.msra.mxu0 %v1573
        %1718 = vmatpush.bf16.msra.mxu0 %v1565
        %1719 = vmatpush.bf16.msra.mxu0 %v1557
        %1720 = vmatpush.bf16.msra.mxu0 %v1549
        %1721 = vmatpush.bf16.msra.mxu0 %v1541
        %1722 = vmatpush.bf16.msra.mxu0 %v1533
        %1723 = vmatpush.bf16.msra.mxu0 %v1525
        %1724 = vmatpush.bf16.msra.mxu0 %v1517
        %1725 = vmatmul.bf16.gmra.mxu0 %v1254
        %v1726 = vpop.f32.mrf.mxu0
        %v1727 = vadd.f32 0.0, %v1726
        %v1728 = vpop.f32.mrf.mxu0
        %1729 = vdwg.mxu0
        %1730 = vmatpush.bf16.msra.mxu0 %v1574
        %1731 = vmatpush.bf16.msra.mxu0 %v1566
        %1732 = vmatpush.bf16.msra.mxu0 %v1558
        %1733 = vmatpush.bf16.msra.mxu0 %v1550
        %1734 = vmatpush.bf16.msra.mxu0 %v1542
        %1735 = vmatpush.bf16.msra.mxu0 %v1534
        %1736 = vmatpush.bf16.msra.mxu0 %v1526
        %1737 = vmatpush.bf16.msra.mxu0 %v1518
        %1738 = vmatmul.bf16.gmra.mxu0 %v1254
        %v1739 = vpop.f32.mrf.mxu0
        %v1740 = vadd.f32 0.0, %v1739
        %v1741 = vpop.f32.mrf.mxu0
        %1742 = vdwg.mxu0
        %v1743 = vxor.u32 %v1649, 2147483648
        %v1744 = vxor.u32 %v1662, 2147483648
        %v1745 = vxor.u32 %v1675, 2147483648
        %v1746 = vxor.u32 %v1688, 2147483648
        %v1747 = vmul.f32 %v1743, 1.442695
        %v1748 = vpow.pop %v1747
        %v1749 = vmul.f32 %v1744, 1.442695
        %v1750 = vpow.pop %v1749
        %v1751 = vmul.f32 %v1745, 1.442695
        %v1752 = vpow.pop %v1751
        %v1753 = vmul.f32 %v1746, 1.442695
        %v1754 = vpow.pop %v1753
        %v1755 = vadd.f32 %v1748, 1.0
        %v1756 = vadd.f32 %v1750, 1.0
        %v1757 = vadd.f32 %v1752, 1.0
        %v1758 = vadd.f32 %v1754, 1.0
        %v1759 = vrcp.pop %v1755
        %v1760 = vmul.f32 %v1755, %v1759
        %v1761 = vsub.f32 1.0, %v1760
        %v1762 = vmul.f32 %v1759, %v1761
        %v1763 = vadd.f32 %v1759, %v1762
        %vm1764 = vweird.f32 %v1755
        %vm1765 = vweird.f32 %v1759
        %vm1766 = vmor %vm1764, %vm1765
        %v1767 = vsel %vm1766, %v1759, %v1763
        %v1768 = vand.u32 2147483647, %v1755
        %vm1769 = vcmp.eq.f32.partialorder %v1768, 8.507059e+37
        %v1770 = vand.u32 %v1755, 2147483648
        %v1771 = vor.u32 1.1754944e-38, %v1770
        %v1772 = vsel %vm1769, %v1771, %v1767
        %v1773 = vmul.f32 1.0, %v1772
        %v1774 = vrcp.pop %v1756
        %v1775 = vmul.f32 %v1756, %v1774
        %v1776 = vsub.f32 1.0, %v1775
        %v1777 = vmul.f32 %v1774, %v1776
        %v1778 = vadd.f32 %v1774, %v1777
        %vm1779 = vweird.f32 %v1756
        %vm1780 = vweird.f32 %v1774
        %vm1781 = vmor %vm1779, %vm1780
        %v1782 = vsel %vm1781, %v1774, %v1778
        %v1783 = vand.u32 2147483647, %v1756
        %vm1784 = vcmp.eq.f32.partialorder %v1783, 8.507059e+37
        %v1785 = vand.u32 %v1756, 2147483648
        %v1786 = vor.u32 1.1754944e-38, %v1785
        %v1787 = vsel %vm1784, %v1786, %v1782
        %v1788 = vmul.f32 1.0, %v1787
        %v1789 = vrcp.pop %v1757
        %v1790 = vmul.f32 %v1757, %v1789
        %v1791 = vsub.f32 1.0, %v1790
        %v1792 = vmul.f32 %v1789, %v1791
        %v1793 = vadd.f32 %v1789, %v1792
        %vm1794 = vweird.f32 %v1757
        %vm1795 = vweird.f32 %v1789
        %vm1796 = vmor %vm1794, %vm1795
        %v1797 = vsel %vm1796, %v1789, %v1793
        %v1798 = vand.u32 2147483647, %v1757
        %vm1799 = vcmp.eq.f32.partialorder %v1798, 8.507059e+37
        %v1800 = vand.u32 %v1757, 2147483648
        %v1801 = vor.u32 1.1754944e-38, %v1800
        %v1802 = vsel %vm1799, %v1801, %v1797
        %v1803 = vmul.f32 1.0, %v1802
        %v1804 = vrcp.pop %v1758
        %v1805 = vmul.f32 %v1758, %v1804
        %v1806 = vsub.f32 1.0, %v1805
        %v1807 = vmul.f32 %v1804, %v1806
        %v1808 = vadd.f32 %v1804, %v1807
        %vm1809 = vweird.f32 %v1758
        %vm1810 = vweird.f32 %v1804
        %vm1811 = vmor %vm1809, %vm1810
        %v1812 = vsel %vm1811, %v1804, %v1808
        %v1813 = vand.u32 2147483647, %v1758
        %vm1814 = vcmp.eq.f32.partialorder %v1813, 8.507059e+37
        %v1815 = vand.u32 %v1758, 2147483648
        %v1816 = vor.u32 1.1754944e-38, %v1815
        %v1817 = vsel %vm1814, %v1816, %v1812
        %v1818 = vmul.f32 1.0, %v1817
        %v1819 = vmul.f32 %v1649, %v1773
        %v1820 = vmul.f32 %v1662, %v1788
        %v1821 = vmul.f32 %v1675, %v1803
        %v1822 = vmul.f32 %v1688, %v1818
        %v1823 = vmul.f32 %v1819, %v1701
        %v1824 = vmul.f32 %v1820, %v1714
        %v1825 = vmul.f32 %v1821, %v1727
        %v1826 = vmul.f32 %v1822, %v1740
        %v1827 = vpack.c.bf16 %v1823, %v1823
        %v1828 = vpack.c.bf16 %v1824, %v1824
        %v1829 = vpack.c.bf16 %v1825, %v1825
        %v1830 = vpack.c.bf16 %v1826, %v1826
        %v1831 = vld [vmem:[#allocation7] sm:$0xf]
        %v1832 = vld [vmem:[#allocation7 + $0x4] sm:$0xf]
        %v1833 = vld [vmem:[#allocation7 + $0x8] sm:$0xf]
        %v1834 = vld [vmem:[#allocation7 + $0xc] sm:$0xf]
        %v1835 = vld [vmem:[#allocation7 + $0x10] sm:$0xf]
        %v1836 = vld [vmem:[#allocation7 + $0x14] sm:$0xf]
        %v1837 = vld [vmem:[#allocation7 + $0x18] sm:$0xf]
        %v1838 = vld [vmem:[#allocation7 + $0x1c] sm:$0xf]
        %v1839 = vld [vmem:[#allocation7 + $0x20] sm:$0xf]
        %v1840 = vld [vmem:[#allocation7 + $0x24] sm:$0xf]
        %v1841 = vld [vmem:[#allocation7 + $0x28] sm:$0xf]
        %v1842 = vld [vmem:[#allocation7 + $0x2c] sm:$0xf]
        %v1843 = vld [vmem:[#allocation7 + $0x30] sm:$0xf]
        %v1844 = vld [vmem:[#allocation7 + $0x34] sm:$0xf]
        %v1845 = vld [vmem:[#allocation7 + $0x38] sm:$0xf]
        %v1846 = vld [vmem:[#allocation7 + $0x3c] sm:$0xf]
        %v1847 = vld [vmem:[#allocation7 + $0x40] sm:$0xf]
        %v1848 = vld [vmem:[#allocation7 + $0x44] sm:$0xf]
        %v1849 = vld [vmem:[#allocation7 + $0x48] sm:$0xf]
        %v1850 = vld [vmem:[#allocation7 + $0x4c] sm:$0xf]
        %v1851 = vld [vmem:[#allocation7 + $0x50] sm:$0xf]
        %v1852 = vld [vmem:[#allocation7 + $0x54] sm:$0xf]
        %v1853 = vld [vmem:[#allocation7 + $0x58] sm:$0xf]
        %v1854 = vld [vmem:[#allocation7 + $0x5c] sm:$0xf]
        %v1855 = vld [vmem:[#allocation7 + $0x60] sm:$0xf]
        %v1856 = vld [vmem:[#allocation7 + $0x64] sm:$0xf]
        %v1857 = vld [vmem:[#allocation7 + $0x68] sm:$0xf]
        %v1858 = vld [vmem:[#allocation7 + $0x6c] sm:$0xf]
        %v1859 = vld [vmem:[#allocation7 + $0x70] sm:$0xf]
        %v1860 = vld [vmem:[#allocation7 + $0x74] sm:$0xf]
        %v1861 = vld [vmem:[#allocation7 + $0x78] sm:$0xf]
        %v1862 = vld [vmem:[#allocation7 + $0x7c] sm:$0xf]
        %v1863 = vld [vmem:[#allocation7 + $0x80] sm:$0xf]
        %v1864 = vld [vmem:[#allocation7 + $0x84] sm:$0xf]
        %v1865 = vld [vmem:[#allocation7 + $0x88] sm:$0xf]
        %v1866 = vld [vmem:[#allocation7 + $0x8c] sm:$0xf]
        %v1867 = vld [vmem:[#allocation7 + $0x90] sm:$0xf]
        %v1868 = vld [vmem:[#allocation7 + $0x94] sm:$0xf]
        %v1869 = vld [vmem:[#allocation7 + $0x98] sm:$0xf]
        %v1870 = vld [vmem:[#allocation7 + $0x9c] sm:$0xf]
        %v1871 = vld [vmem:[#allocation7 + $0xa0] sm:$0xf]
        %v1872 = vld [vmem:[#allocation7 + $0xa4] sm:$0xf]
        %v1873 = vld [vmem:[#allocation7 + $0xa8] sm:$0xf]
        %v1874 = vld [vmem:[#allocation7 + $0xac] sm:$0xf]
        %v1875 = vld [vmem:[#allocation7 + $0xb0] sm:$0xf]
        %v1876 = vld [vmem:[#allocation7 + $0xb4] sm:$0xf]
        %v1877 = vld [vmem:[#allocation7 + $0xb8] sm:$0xf]
        %v1878 = vld [vmem:[#allocation7 + $0xbc] sm:$0xf]
        %v1879 = vld [vmem:[#allocation7 + $0xc0] sm:$0xf]
        %v1880 = vld [vmem:[#allocation7 + $0xc4] sm:$0xf]
        %v1881 = vld [vmem:[#allocation7 + $0xc8] sm:$0xf]
        %v1882 = vld [vmem:[#allocation7 + $0xcc] sm:$0xf]
        %v1883 = vld [vmem:[#allocation7 + $0xd0] sm:$0xf]
        %v1884 = vld [vmem:[#allocation7 + $0xd4] sm:$0xf]
        %v1885 = vld [vmem:[#allocation7 + $0xd8] sm:$0xf]
        %v1886 = vld [vmem:[#allocation7 + $0xdc] sm:$0xf]
        %v1887 = vld [vmem:[#allocation7 + $0xe0] sm:$0xf]
        %v1888 = vld [vmem:[#allocation7 + $0xe4] sm:$0xf]
        %v1889 = vld [vmem:[#allocation7 + $0xe8] sm:$0xf]
        %v1890 = vld [vmem:[#allocation7 + $0xec] sm:$0xf]
        %v1891 = vld [vmem:[#allocation7 + $0xf0] sm:$0xf]
        %v1892 = vld [vmem:[#allocation7 + $0xf4] sm:$0xf]
        %v1893 = vld [vmem:[#allocation7 + $0xf8] sm:$0xf]
        %v1894 = vld [vmem:[#allocation7 + $0xfc] sm:$0xf]
        %v1959 = vunpack.c.l.b16 %v1831
        %v1960 = vunpack.c.l.b16 %v1832
        %v1961 = vunpack.c.l.b16 %v1833
        %v1962 = vunpack.c.l.b16 %v1834
        %v1963 = vunpack.c.l.b16 %v1835
        %v1964 = vunpack.c.l.b16 %v1836
        %v1965 = vunpack.c.l.b16 %v1837
        %v1966 = vunpack.c.l.b16 %v1838
        %v1967 = vunpack.c.l.b16 %v1839
        %v1968 = vunpack.c.l.b16 %v1840
        %v1969 = vunpack.c.l.b16 %v1841
        %v1970 = vunpack.c.l.b16 %v1842
        %v1971 = vunpack.c.l.b16 %v1843
        %v1972 = vunpack.c.l.b16 %v1844
        %v1973 = vunpack.c.l.b16 %v1845
        %v1974 = vunpack.c.l.b16 %v1846
        %v1975 = vunpack.c.l.b16 %v1847
        %v1976 = vunpack.c.l.b16 %v1848
        %v1977 = vunpack.c.l.b16 %v1849
        %v1978 = vunpack.c.l.b16 %v1850
        %v1979 = vunpack.c.l.b16 %v1851
        %v1980 = vunpack.c.l.b16 %v1852
        %v1981 = vunpack.c.l.b16 %v1853
        %v1982 = vunpack.c.l.b16 %v1854
        %v1983 = vunpack.c.l.b16 %v1855
        %v1984 = vunpack.c.l.b16 %v1856
        %v1985 = vunpack.c.l.b16 %v1857
        %v1986 = vunpack.c.l.b16 %v1858
        %v1987 = vunpack.c.l.b16 %v1859
        %v1988 = vunpack.c.l.b16 %v1860
        %v1989 = vunpack.c.l.b16 %v1861
        %v1990 = vunpack.c.l.b16 %v1862
        %v1991 = vunpack.c.l.b16 %v1863
        %v1992 = vunpack.c.l.b16 %v1864
        %v1993 = vunpack.c.l.b16 %v1865
        %v1994 = vunpack.c.l.b16 %v1866
        %v1995 = vunpack.c.l.b16 %v1867
        %v1996 = vunpack.c.l.b16 %v1868
        %v1997 = vunpack.c.l.b16 %v1869
        %v1998 = vunpack.c.l.b16 %v1870
        %v1999 = vunpack.c.l.b16 %v1871
        %v2000 = vunpack.c.l.b16 %v1872
        %v2001 = vunpack.c.l.b16 %v1873
        %v2002 = vunpack.c.l.b16 %v1874
        %v2003 = vunpack.c.l.b16 %v1875
        %v2004 = vunpack.c.l.b16 %v1876
        %v2005 = vunpack.c.l.b16 %v1877
        %v2006 = vunpack.c.l.b16 %v1878
        %v2007 = vunpack.c.l.b16 %v1879
        %v2008 = vunpack.c.l.b16 %v1880
        %v2009 = vunpack.c.l.b16 %v1881
        %v2010 = vunpack.c.l.b16 %v1882
        %v2011 = vunpack.c.l.b16 %v1883
        %v2012 = vunpack.c.l.b16 %v1884
        %v2013 = vunpack.c.l.b16 %v1885
        %v2014 = vunpack.c.l.b16 %v1886
        %v2015 = vunpack.c.l.b16 %v1887
        %v2016 = vunpack.c.l.b16 %v1888
        %v2017 = vunpack.c.l.b16 %v1889
        %v2018 = vunpack.c.l.b16 %v1890
        %v2019 = vunpack.c.l.b16 %v1891
        %v2020 = vunpack.c.l.b16 %v1892
        %v2021 = vunpack.c.l.b16 %v1893
        %v2022 = vunpack.c.l.b16 %v1894
        %v2023 = vpack.c.b16 %v1960, %v1959
        %v2024 = vpack.c.b16 %v1962, %v1961
        %v2025 = vpack.c.b16 %v1964, %v1963
        %v2026 = vpack.c.b16 %v1966, %v1965
        %v2027 = vpack.c.b16 %v1968, %v1967
        %v2028 = vpack.c.b16 %v1970, %v1969
        %v2029 = vpack.c.b16 %v1972, %v1971
        %v2030 = vpack.c.b16 %v1974, %v1973
        %v2031 = vpack.c.b16 %v1976, %v1975
        %v2032 = vpack.c.b16 %v1978, %v1977
        %v2033 = vpack.c.b16 %v1980, %v1979
        %v2034 = vpack.c.b16 %v1982, %v1981
        %v2035 = vpack.c.b16 %v1984, %v1983
        %v2036 = vpack.c.b16 %v1986, %v1985
        %v2037 = vpack.c.b16 %v1988, %v1987
        %v2038 = vpack.c.b16 %v1990, %v1989
        %v2039 = vpack.c.b16 %v1992, %v1991
        %v2040 = vpack.c.b16 %v1994, %v1993
        %v2041 = vpack.c.b16 %v1996, %v1995
        %v2042 = vpack.c.b16 %v1998, %v1997
        %v2043 = vpack.c.b16 %v2000, %v1999
        %v2044 = vpack.c.b16 %v2002, %v2001
        %v2045 = vpack.c.b16 %v2004, %v2003
        %v2046 = vpack.c.b16 %v2006, %v2005
        %v2047 = vpack.c.b16 %v2008, %v2007
        %v2048 = vpack.c.b16 %v2010, %v2009
        %v2049 = vpack.c.b16 %v2012, %v2011
        %v2050 = vpack.c.b16 %v2014, %v2013
        %v2051 = vpack.c.b16 %v2016, %v2015
        %v2052 = vpack.c.b16 %v2018, %v2017
        %v2053 = vpack.c.b16 %v2020, %v2019
        %v2054 = vpack.c.b16 %v2022, %v2021
        %2087 = vmatpush.bf16.msra.mxu0 %v2030
        %2088 = vmatpush.bf16.msra.mxu0 %v2029
        %2089 = vmatpush.bf16.msra.mxu0 %v2028
        %2090 = vmatpush.bf16.msra.mxu0 %v2027
        %2091 = vmatpush.bf16.msra.mxu0 %v2026
        %2092 = vmatpush.bf16.msra.mxu0 %v2025
        %2093 = vmatpush.bf16.msra.mxu0 %v2024
        %2094 = vmatpush.bf16.msra.mxu0 %v2023
        %2095 = vmatmul.bf16.gmra.mxu0 %v1827
        %v2096 = vpop.f32.mrf.mxu0
        %v2097 = vadd.f32 0.0, %v2096
        %v2098 = vpop.f32.mrf.mxu0
        %2099 = vdwg.mxu0
        %2100 = vmatpush.bf16.msra.mxu0 %v2038
        %2101 = vmatpush.bf16.msra.mxu0 %v2037
        %2102 = vmatpush.bf16.msra.mxu0 %v2036
        %2103 = vmatpush.bf16.msra.mxu0 %v2035
        %2104 = vmatpush.bf16.msra.mxu0 %v2034
        %2105 = vmatpush.bf16.msra.mxu0 %v2033
        %2106 = vmatpush.bf16.msra.mxu0 %v2032
        %2107 = vmatpush.bf16.msra.mxu0 %v2031
        %2108 = vmatmul.bf16.gmra.mxu0 %v1828
        %v2109 = vpop.f32.mrf.mxu0
        %v2110 = vadd.f32 %v2097, %v2109
        %v2111 = vpop.f32.mrf.mxu0
        %2112 = vdwg.mxu0
        %2113 = vmatpush.bf16.msra.mxu0 %v2046
        %2114 = vmatpush.bf16.msra.mxu0 %v2045
        %2115 = vmatpush.bf16.msra.mxu0 %v2044
        %2116 = vmatpush.bf16.msra.mxu0 %v2043
        %2117 = vmatpush.bf16.msra.mxu0 %v2042
        %2118 = vmatpush.bf16.msra.mxu0 %v2041
        %2119 = vmatpush.bf16.msra.mxu0 %v2040
        %2120 = vmatpush.bf16.msra.mxu0 %v2039
        %2121 = vmatmul.bf16.gmra.mxu0 %v1829
        %v2122 = vpop.f32.mrf.mxu0
        %v2123 = vadd.f32 %v2110, %v2122
        %v2124 = vpop.f32.mrf.mxu0
        %2125 = vdwg.mxu0
        %2126 = vmatpush.bf16.msra.mxu0 %v2054
        %2127 = vmatpush.bf16.msra.mxu0 %v2053
        %2128 = vmatpush.bf16.msra.mxu0 %v2052
        %2129 = vmatpush.bf16.msra.mxu0 %v2051
        %2130 = vmatpush.bf16.msra.mxu0 %v2050
        %2131 = vmatpush.bf16.msra.mxu0 %v2049
        %2132 = vmatpush.bf16.msra.mxu0 %v2048
        %2133 = vmatpush.bf16.msra.mxu0 %v2047
        %2134 = vmatmul.bf16.gmra.mxu0 %v1830
        %v2135 = vpop.f32.mrf.mxu0
        %v2136 = vadd.f32 %v2123, %v2135
        %v2137 = vpop.f32.mrf.mxu0
        %2138 = vdwg.mxu0
        %v2139 = vadd.f32 %v1232, %v2136
        %2140 = vst [vmem:[%s467] sm:$0xff] %v2139
        %s2141 = sand.u32 %s298, 1
        %s2142 = scalar_lea.sflag [#allocation4], %s2141
        %s2143 = sand.u32 %s298, 1
        %s2144 = smul.addr %s2143, 8
        %s2145 = scalar_lea.vmem [#allocation8], %s2144
        // Predicated region
        $region81: #{decoder_layer.1} parent=67 // pred_check
          %p2146 = pneg %p308
        $region82: #{decoder_layer.1} parent=67 // pred_check_branch
          %2148 = sbr.rel (%p2146) target = $region84
        $region83: #{decoder_layer.1} parent=67 // pred_region
          %2150 = vsyncadd %s2142, 0
          %s2151 = smul.addr %s28, 8
          %s2152 = scalar_lea.hbm %s12, %s2151
          %s2154 = sshll.u32 %s2145, 4
          %s2155 = int_to_ptr.vmem [resolvable:$true] %s2154
          %s2156 = sshll.u32 %s2152, 4
          %s2157 = int_to_ptr.hbm [resolvable:$true] %s2156
          %2159 = dma.vmem_to_hbm [thread:$0]  %s2155, 128, %s2157, %s2142
        $region84: #{decoder_layer.1} parent=67 // pred_fallthru
          _
      $region68: #{decoder_layer.1} parent=5 // pred_fallthru
        _
      %p2160 = scmp.le.s32.totalorder 2, %s23
      // Predicated region
      $region85: #{decoder_layer.1} parent=5 // pred_check
        %p2161 = pneg %p2160
      $region86: #{decoder_layer.1} parent=5 // pred_check_branch
        %2163 = sbr.rel (%p2161) target = $region88
      $region87: #{decoder_layer.1} parent=5 // pred_region
        %s2164 = ssub.s32 %s23, 2
        // Predicated region
        $region89: #{decoder_layer.1} parent=87 // pred_check
          %p2165 = pneg %p314
        $region90: #{decoder_layer.1} parent=87 // pred_check_branch
          %2167 = sbr.rel (%p2165) target = $region92
        $region91: #{decoder_layer.1} parent=87 // pred_region
          %s2168 = sand.u32 %s299, 1
          %s2169 = scalar_lea.sflag [#allocation4], %s2168
          %s2170 = sand.u32 %s299, 1
          %s2171 = smul.addr %s2170, 8
          %s2172 = scalar_lea.vmem [#allocation8], %s2171
          %2174 = dma.done %s2169, 128
        $region92: #{decoder_layer.1} parent=87 // pred_fallthru
          _
      $region88: #{decoder_layer.1} parent=5 // pred_fallthru
        _
    $region6: #{decoder_layer.1} parent=1 // loop_footer
      %s27 = sadd.s32 1, %s23
    $region7: #{decoder_layer.1} parent=1 // loop_footer_branch
      %22 = sbr.rel target = $region3
    $region8: #{decoder_layer.1} parent=1 // loop_exit
      _
    %2175 = vsyncpa [#allocation3], 1
    %s2176 = scalar_lea.sflag [#allocation3], 1
    %2177 = vsyncpa %s2176, 1
    %2178 = vsyncpa [#allocation6], 1
    %2179 = vsyncpa [#allocation4], 1
    %s2180 = scalar_lea.sflag [#allocation4], 1
    %2181 = vsyncpa %s2180, 1

</llo_original>
